<compile_context>
chip_gen: v6e
topology: v6e:2x2x1
jax: 0.10.0
libtpu: 0.0.40
codegen_flags: <defaults>
</compile_context>

<pallas_src>
import functools

import jax
import jax.numpy as jnp
from jax.experimental import pallas as pl
from jax.experimental.pallas import tpu as pltpu

LANE = 128      # fc2 output padded to one full lane width -> unmasked store
SUBLANE = 8     # batch padded to a multiple of 8 sublanes


# ----------------------------------------------------------------------------
# Fused Pallas kernel: all LSTM layers + fc2 on the last timestep
# ----------------------------------------------------------------------------
def fused_lstm_fc_kernel(x_ref, *refs, num_layers, hidden_size, seq_len,
                         batch_tile):
    """Fused multi-layer LSTM + final Linear.

    x_ref:    (T, BT, D_in)  time-major input, batch padded to BT (mult. of 8)
    per layer l (host-preprocessed):
      w_ih_t: (D_in_l, 4H)   transposed; g-gate columns pre-scaled by 2
      w_hh_t: (H, 4H)        transposed; g-gate columns pre-scaled by 2
      b:      (1, 4H)        b_ih + b_hh; g-gate columns pre-scaled by 2
    fc2_w_t:  (H, LANE)      fc2 weight, transposed, zero-padded to 128 lanes
    fc2_b:    (1, LANE)      fc2 bias, zero-padded
    out_ref:  (BT, LANE)     fc2(last hidden state of top layer), lane-dense
    """
    H, T, BT = hidden_size, seq_len, batch_tile

    layer_refs = [(refs[3 * l], refs[3 * l + 1], refs[3 * l + 2])
                  for l in range(num_layers)]
    fc2_w_ref = refs[3 * num_layers]
    fc2_b_ref = refs[3 * num_layers + 1]
    out_ref = refs[3 * num_layers + 2]

    # Layer 0's input is known up front -> hoist its projection into one MXU
    # matmul covering all T steps, with the bias folded in once.  The
    # (T,BT,D)->(T*BT,D) reshape only regroups whole (8, lane) tiles, so it is
    # layout-preserving (no data movement).
    w_ih0_ref, _, b0_ref = layer_refs[0]
    x2d = x_ref[...].reshape(T * BT, x_ref.shape[-1])
    xproj0 = (jnp.dot(x2d, w_ih0_ref[...], preferred_element_type=jnp.float32)
              + b0_ref[...])
    xproj0 = xproj0.reshape(T, BT, 4 * H)     # per-step slab = one aligned tile

    # Load weights once; they are tiny and stay resident.
    w_hh = [layer_refs[l][1][...] for l in range(num_layers)]
    w_ih = [None] + [layer_refs[l][0][...] for l in range(1, num_layers)]
    bias = [None] + [layer_refs[l][2][...] for l in range(1, num_layers)]

    h = [None] * num_layers
    c = [None] * num_layers

    # Statically unrolled over (t, layer).  Layer l step t only needs
    # layer l-1 step t (just computed) and layer l step t-1, so the scheduler
    # can execute the layers as a wavefront (serial chain length T + L - 1).
    for t in range(T):
        for l in range(num_layers):
            if l == 0:
                pre = xproj0[t]                                    # (BT, 4H)
            else:
                pre = (jnp.dot(h[l - 1], w_ih[l],
                               preferred_element_type=jnp.float32)
                       + bias[l])
            if t > 0:   # h, c are zero at t == 0 -> skip the recurrent matmul
                pre = pre + jnp.dot(h[l], w_hh[l],
                                    preferred_element_type=jnp.float32)

            # Single EUP push covers all four gates; tanh for the (host
            # pre-scaled) g columns is recovered as 2*sigmoid(2x) - 1.
            sig = jax.nn.sigmoid(pre)                              # (BT, 4H)
            i_g = sig[:, 0 * H:1 * H]
            f_g = sig[:, 1 * H:2 * H]
            g_g = 2.0 * sig[:, 2 * H:3 * H] - 1.0
            o_g = sig[:, 3 * H:4 * H]

            c[l] = i_g * g_g if t == 0 else f_g * c[l] + i_g * g_g
            h[l] = o_g * jnp.tanh(c[l])

    # TODO(synk): cast matmul operands to bf16 (keep f32 accumulation) once
    # H/D grow enough for the hoisted projection / fc2 to stop being
    # latency-bound (v6e/v7x MXU runs bf16 at full rate).
    out_ref[...] = (jnp.dot(h[-1], fc2_w_ref[...],
                            preferred_element_type=jnp.float32)
                    + fc2_b_ref[...])


# ----------------------------------------------------------------------------
# Wrapper
# ----------------------------------------------------------------------------
def my_module_forward(x, params, hidden_size, num_outputs,
                      batch_tile=SUBLANE):
    """x: (B, T, num_inputs) — PyTorch batch_first layout."""
    B, T, D = x.shape
    num_layers = len(params["lstm"])

    # Time-major, batch zero-padded to a multiple of 8 sublanes so every
    # per-step slice and every matmul row block is sublane-aligned.
    bt = batch_tile
    Bp = pl.cdiv(B, bt) * bt
    xt = jnp.transpose(x, (1, 0, 2))                       # (T, B, D)
    xt = jnp.pad(xt, ((0, 0), (0, Bp - B), (0, 0)))        # (T, Bp, D)

    inputs = [xt]
    for (w_ih_t, w_hh_t, b) in params["lstm"]:
        inputs += [w_ih_t, w_hh_t, b]
    inputs += [params["fc2_w_t"], params["fc2_b"]]

    def full_spec(arr):
        nd = arr.ndim
        return pl.BlockSpec(arr.shape, lambda b_, _nd=nd: (0,) * _nd)

    in_specs = [pl.BlockSpec((T, bt, D), lambda b_: (0, b_, 0))]
    in_specs += [full_spec(a) for a in inputs[1:]]

    out_pad = pl.pallas_call(
        functools.partial(
            fused_lstm_fc_kernel,
            num_layers=num_layers,
            hidden_size=hidden_size,
            seq_len=T,
            batch_tile=bt,
        ),
        grid=(Bp // bt,),   # batch tiles; "parallel" -> both TCs on v7x
        out_shape=jax.ShapeDtypeStruct((Bp, LANE), jnp.float32),
        in_specs=in_specs,
        out_specs=pl.BlockSpec((bt, LANE), lambda b_: (b_, 0)),
        compiler_params=pltpu.CompilerParams(
            dimension_semantics=("parallel",),
            vmem_limit_bytes=32 * 1024 * 1024),
    )(*inputs)

    # fc1 -> dropout -> relu is dead code in the reference forward (result
    # overwritten by fc2), so it is intentionally not materialized here.
    return out_pad[:B, :num_outputs]


# ----------------------------------------------------------------------------
# Pure-JAX reference (eval-mode semantics of MyModule.forward)
# ----------------------------------------------------------------------------
def reference_forward(x, raw_lstm, fc2_w, fc2_b):
    B, T, _ = x.shape
    seq = x
    for (w_ih, w_hh, b_ih, b_hh) in raw_lstm:
        H = w_hh.shape[1]
        h = jnp.zeros((B, H), jnp.float32)
        c = jnp.zeros((B, H), jnp.float32)
        outs = []
        for t in range(T):
            g = seq[:, t, :] @ w_ih.T + h @ w_hh.T + b_ih + b_hh
            i_g = jax.nn.sigmoid(g[:, 0 * H:1 * H])
            f_g = jax.nn.sigmoid(g[:, 1 * H:2 * H])
            g_g = jnp.tanh(g[:, 2 * H:3 * H])
            o_g = jax.nn.sigmoid(g[:, 3 * H:4 * H])
            c = f_g * c + i_g * g_g
            h = o_g * jnp.tanh(c)
            outs.append(h)
        seq = jnp.stack(outs, axis=1)
    return seq[:, -1, :] @ fc2_w.T + fc2_b


# ----------------------------------------------------------------------------
# Main
# ----------------------------------------------------------------------------
if __name__ == "__main__":
    B, T = 2, 8
    num_inputs, hidden_size, num_layers, num_outputs = 16, 32, 2, 4
    H = hidden_size

    key = jax.random.PRNGKey(0)
    keys = iter(jax.random.split(key, 4 * num_layers + 3))
    scale = 1.0 / jnp.sqrt(hidden_size)

    # g-gate (tanh) columns pre-scaled by 2 so the kernel can use one sigmoid
    # over all four gates: tanh(x) = 2*sigmoid(2x) - 1 (PyTorch gate order
    # i, f, g, o).
    gate_scale = jnp.concatenate([
        jnp.ones((2 * H,), jnp.float32),
        2.0 * jnp.ones((H,), jnp.float32),
        jnp.ones((H,), jnp.float32),
    ])

    raw_lstm = []
    lstm_params = []
    for layer in range(num_layers):
        d_in = num_inputs if layer == 0 else hidden_size
        w_ih = jax.random.uniform(next(keys), (4 * H, d_in),
                                  jnp.float32, -scale, scale)
        w_hh = jax.random.uniform(next(keys), (4 * H, H),
                                  jnp.float32, -scale, scale)
        b_ih = jax.random.uniform(next(keys), (4 * H,),
                                  jnp.float32, -scale, scale)
        b_hh = jax.random.uniform(next(keys), (4 * H,),
                                  jnp.float32, -scale, scale)
        raw_lstm.append((w_ih, w_hh, b_ih, b_hh))
        # Pre-transpose (PyTorch (4H, D) -> (D, 4H)), fold both biases, and
        # pre-scale the g-gate columns.
        lstm_params.append((
            w_ih.T * gate_scale[None, :],
            w_hh.T * gate_scale[None, :],
            ((b_ih + b_hh) * gate_scale).reshape(1, -1),
        ))

    fc2_w = jax.random.uniform(next(keys), (num_outputs, H),
                               jnp.float32, -scale, scale)
    fc2_b = jax.random.uniform(next(keys), (num_outputs,),
                               jnp.float32, -scale, scale)

    # Pre-transpose fc2 and zero-pad its output dim to 128 lanes so the
    # kernel's only store is lane-dense; the wrapper slices back to (B, 4).
    fc2_w_t = jnp.zeros((H, LANE), jnp.float32).at[:, :num_outputs].set(fc2_w.T)
    fc2_b_p = jnp.zeros((1, LANE), jnp.float32).at[:, :num_outputs].set(
        fc2_b[None, :])

    params = {"lstm": lstm_params, "fc2_w_t": fc2_w_t, "fc2_b": fc2_b_p}

    x = jax.random.normal(next(keys), (B, T, num_inputs), jnp.float32)

    fwd = jax.jit(functools.partial(my_module_forward,
                                    hidden_size=hidden_size,
                                    num_outputs=num_outputs))
    out = fwd(x, params)
    jax.block_until_ready(out)

    ref = reference_forward(x, raw_lstm, fc2_w, fc2_b)

    assert out.shape == (B, num_outputs), out.shape
    assert jnp.allclose(out, ref, atol=5e-2, rtol=5e-2), float(
        jnp.max(jnp.abs(out - ref)))
    print("KERNEL_OK")
</pallas_src>

<mosaic_0001>
module attributes {stable_mosaic.version = 11 : i64} {
  func.func @fused_lstm_fc_kernel(%arg0: i32, %arg1: memref<8x8x16xf32, #tpu.memory_space<vmem>>, %arg2: memref<16x128xf32, #tpu.memory_space<vmem>>, %arg3: memref<32x128xf32, #tpu.memory_space<vmem>>, %arg4: memref<1x128xf32, #tpu.memory_space<vmem>>, %arg5: memref<32x128xf32, #tpu.memory_space<vmem>>, %arg6: memref<32x128xf32, #tpu.memory_space<vmem>>, %arg7: memref<1x128xf32, #tpu.memory_space<vmem>>, %arg8: memref<32x128xf32, #tpu.memory_space<vmem>>, %arg9: memref<1x128xf32, #tpu.memory_space<vmem>>, %arg10: memref<8x128xf32, #tpu.memory_space<vmem>>) attributes {dimension_semantics = [#tpu.dimension_semantics<parallel>], iteration_bounds = array<i64: 1>, scalar_prefetch = 0 : i64, scratch_operands = 0 : i64, tpu.core_type = #tpu.core_type<tc>, window_params = [{transform_indices = @transform_0, window_bounds = array<i64: 8, 8, 16>}, {pipeline_mode = #tpu.pipeline_mode<synchronous>, transform_indices = @transform_1, window_bounds = array<i64: 16, 128>}, {pipeline_mode = #tpu.pipeline_mode<synchronous>, transform_indices = @transform_2, window_bounds = array<i64: 32, 128>}, {pipeline_mode = #tpu.pipeline_mode<synchronous>, transform_indices = @transform_3, window_bounds = array<i64: 1, 128>}, {pipeline_mode = #tpu.pipeline_mode<synchronous>, transform_indices = @transform_4, window_bounds = array<i64: 32, 128>}, {pipeline_mode = #tpu.pipeline_mode<synchronous>, transform_indices = @transform_5, window_bounds = array<i64: 32, 128>}, {pipeline_mode = #tpu.pipeline_mode<synchronous>, transform_indices = @transform_6, window_bounds = array<i64: 1, 128>}, {pipeline_mode = #tpu.pipeline_mode<synchronous>, transform_indices = @transform_7, window_bounds = array<i64: 32, 128>}, {pipeline_mode = #tpu.pipeline_mode<synchronous>, transform_indices = @transform_8, window_bounds = array<i64: 1, 128>}, {transform_indices = @transform_9, window_bounds = array<i64: 8, 128>}]} {
    %c0 = arith.constant 0 : index
    %c0_0 = arith.constant 0 : index
    %c0_1 = arith.constant 0 : index
    %0 = vector.load %arg1[%c0, %c0_0, %c0_1] : memref<8x8x16xf32, #tpu.memory_space<vmem>>, vector<8x8x16xf32>
    %1 = vector.shape_cast %0 : vector<8x8x16xf32> to vector<64x16xf32>
    %c0_2 = arith.constant 0 : index
    %c0_3 = arith.constant 0 : index
    %2 = vector.load %arg2[%c0_2, %c0_3] : memref<16x128xf32, #tpu.memory_space<vmem>>, vector<16x128xf32>
    %cst = arith.constant dense<0.000000e+00> : vector<64x128xf32>
    %3 = tpu.matmul %1, %2, %cst {dimension_numbers = #tpu.dot_dimension_numbers<[1], [0], [0], [1], [0, 0, 1, 1], [], []>} : vector<64x16xf32>, vector<16x128xf32>, vector<64x128xf32> -> vector<64x128xf32>
    %c0_4 = arith.constant 0 : index
    %c0_5 = arith.constant 0 : index
    %4 = vector.load %arg4[%c0_4, %c0_5] : memref<1x128xf32, #tpu.memory_space<vmem>>, vector<1x128xf32>
    %5 = vector.broadcast %4 : vector<1x128xf32> to vector<64x128xf32>
    %6 = arith.addf %3, %5 : vector<64x128xf32>
    %7 = vector.shape_cast %6 : vector<64x128xf32> to vector<8x8x128xf32>
    %c0_6 = arith.constant 0 : index
    %c0_7 = arith.constant 0 : index
    %8 = vector.load %arg3[%c0_6, %c0_7] : memref<32x128xf32, #tpu.memory_space<vmem>>, vector<32x128xf32>
    %c0_8 = arith.constant 0 : index
    %c0_9 = arith.constant 0 : index
    %9 = vector.load %arg6[%c0_8, %c0_9] : memref<32x128xf32, #tpu.memory_space<vmem>>, vector<32x128xf32>
    %c0_10 = arith.constant 0 : index
    %c0_11 = arith.constant 0 : index
    %10 = vector.load %arg5[%c0_10, %c0_11] : memref<32x128xf32, #tpu.memory_space<vmem>>, vector<32x128xf32>
    %c0_12 = arith.constant 0 : index
    %c0_13 = arith.constant 0 : index
    %11 = vector.load %arg7[%c0_12, %c0_13] : memref<1x128xf32, #tpu.memory_space<vmem>>, vector<1x128xf32>
    %12 = vector.extract_strided_slice %7 {offsets = [0, 0, 0], sizes = [1, 8, 128], strides = [1, 1, 1]} : vector<8x8x128xf32> to vector<1x8x128xf32>
    %13 = vector.shape_cast %12 : vector<1x8x128xf32> to vector<8x128xf32>
    %14 = arith.negf %13 : vector<8x128xf32>
    %15 = math.exp %14 : vector<8x128xf32>
    %cst_14 = arith.constant 1.000000e+00 : f32
    %16 = vector.broadcast %cst_14 : f32 to vector<8x128xf32>
    %17 = arith.addf %16, %15 : vector<8x128xf32>
    %18 = arith.divf %16, %17 : vector<8x128xf32>
    %19 = vector.extract_strided_slice %18 {offsets = [0, 0], sizes = [8, 32], strides = [1, 1]} : vector<8x128xf32> to vector<8x32xf32>
    %20 = vector.extract_strided_slice %18 {offsets = [0, 64], sizes = [8, 32], strides = [1, 1]} : vector<8x128xf32> to vector<8x32xf32>
    %cst_15 = arith.constant 2.000000e+00 : f32
    %21 = vector.broadcast %cst_15 : f32 to vector<8x32xf32>
    %22 = arith.mulf %21, %20 : vector<8x32xf32>
    %cst_16 = arith.constant 1.000000e+00 : f32
    %23 = vector.broadcast %cst_16 : f32 to vector<8x32xf32>
    %24 = arith.subf %22, %23 : vector<8x32xf32>
    %25 = vector.extract_strided_slice %18 {offsets = [0, 96], sizes = [8, 32], strides = [1, 1]} : vector<8x128xf32> to vector<8x32xf32>
    %26 = arith.mulf %19, %24 : vector<8x32xf32>
    %27 = math.tanh %26 : vector<8x32xf32>
    %28 = arith.mulf %25, %27 : vector<8x32xf32>
    %cst_17 = arith.constant dense<0.000000e+00> : vector<8x128xf32>
    %29 = tpu.matmul %28, %10, %cst_17 {dimension_numbers = #tpu.dot_dimension_numbers<[1], [0], [0], [1], [0, 0, 1, 1], [], []>} : vector<8x32xf32>, vector<32x128xf32>, vector<8x128xf32> -> vector<8x128xf32>
    %30 = vector.broadcast %11 : vector<1x128xf32> to vector<8x128xf32>
    %31 = arith.addf %29, %30 : vector<8x128xf32>
    %32 = arith.negf %31 : vector<8x128xf32>
    %33 = math.exp %32 : vector<8x128xf32>
    %cst_18 = arith.constant 1.000000e+00 : f32
    %34 = vector.broadcast %cst_18 : f32 to vector<8x128xf32>
    %35 = arith.addf %34, %33 : vector<8x128xf32>
    %36 = arith.divf %34, %35 : vector<8x128xf32>
    %37 = vector.extract_strided_slice %36 {offsets = [0, 0], sizes = [8, 32], strides = [1, 1]} : vector<8x128xf32> to vector<8x32xf32>
    %38 = vector.extract_strided_slice %36 {offsets = [0, 64], sizes = [8, 32], strides = [1, 1]} : vector<8x128xf32> to vector<8x32xf32>
    %cst_19 = arith.constant 2.000000e+00 : f32
    %39 = vector.broadcast %cst_19 : f32 to vector<8x32xf32>
    %40 = arith.mulf %39, %38 : vector<8x32xf32>
    %cst_20 = arith.constant 1.000000e+00 : f32
    %41 = vector.broadcast %cst_20 : f32 to vector<8x32xf32>
    %42 = arith.subf %40, %41 : vector<8x32xf32>
    %43 = vector.extract_strided_slice %36 {offsets = [0, 96], sizes = [8, 32], strides = [1, 1]} : vector<8x128xf32> to vector<8x32xf32>
    %44 = arith.mulf %37, %42 : vector<8x32xf32>
    %45 = math.tanh %44 : vector<8x32xf32>
    %46 = arith.mulf %43, %45 : vector<8x32xf32>
    %47 = vector.extract_strided_slice %7 {offsets = [1, 0, 0], sizes = [1, 8, 128], strides = [1, 1, 1]} : vector<8x8x128xf32> to vector<1x8x128xf32>
    %48 = vector.shape_cast %47 : vector<1x8x128xf32> to vector<8x128xf32>
    %cst_21 = arith.constant dense<0.000000e+00> : vector<8x128xf32>
    %49 = tpu.matmul %28, %8, %cst_21 {dimension_numbers = #tpu.dot_dimension_numbers<[1], [0], [0], [1], [0, 0, 1, 1], [], []>} : vector<8x32xf32>, vector<32x128xf32>, vector<8x128xf32> -> vector<8x128xf32>
    %50 = arith.addf %48, %49 : vector<8x128xf32>
    %51 = arith.negf %50 : vector<8x128xf32>
    %52 = math.exp %51 : vector<8x128xf32>
    %cst_22 = arith.constant 1.000000e+00 : f32
    %53 = vector.broadcast %cst_22 : f32 to vector<8x128xf32>
    %54 = arith.addf %53, %52 : vector<8x128xf32>
    %55 = arith.divf %53, %54 : vector<8x128xf32>
    %56 = vector.extract_strided_slice %55 {offsets = [0, 0], sizes = [8, 32], strides = [1, 1]} : vector<8x128xf32> to vector<8x32xf32>
    %57 = vector.extract_strided_slice %55 {offsets = [0, 32], sizes = [8, 32], strides = [1, 1]} : vector<8x128xf32> to vector<8x32xf32>
    %58 = vector.extract_strided_slice %55 {offsets = [0, 64], sizes = [8, 32], strides = [1, 1]} : vector<8x128xf32> to vector<8x32xf32>
    %cst_23 = arith.constant 2.000000e+00 : f32
    %59 = vector.broadcast %cst_23 : f32 to vector<8x32xf32>
    %60 = arith.mulf %59, %58 : vector<8x32xf32>
    %cst_24 = arith.constant 1.000000e+00 : f32
    %61 = vector.broadcast %cst_24 : f32 to vector<8x32xf32>
    %62 = arith.subf %60, %61 : vector<8x32xf32>
    %63 = vector.extract_strided_slice %55 {offsets = [0, 96], sizes = [8, 32], strides = [1, 1]} : vector<8x128xf32> to vector<8x32xf32>
    %64 = arith.mulf %57, %26 : vector<8x32xf32>
    %65 = arith.mulf %56, %62 : vector<8x32xf32>
    %66 = arith.addf %64, %65 : vector<8x32xf32>
    %67 = math.tanh %66 : vector<8x32xf32>
    %68 = arith.mulf %63, %67 : vector<8x32xf32>
    %cst_25 = arith.constant dense<0.000000e+00> : vector<8x128xf32>
    %69 = tpu.matmul %68, %10, %cst_25 {dimension_numbers = #tpu.dot_dimension_numbers<[1], [0], [0], [1], [0, 0, 1, 1], [], []>} : vector<8x32xf32>, vector<32x128xf32>, vector<8x128xf32> -> vector<8x128xf32>
    %70 = vector.broadcast %11 : vector<1x128xf32> to vector<8x128xf32>
    %71 = arith.addf %69, %70 : vector<8x128xf32>
    %cst_26 = arith.constant dense<0.000000e+00> : vector<8x128xf32>
    %72 = tpu.matmul %46, %9, %cst_26 {dimension_numbers = #tpu.dot_dimension_numbers<[1], [0], [0], [1], [0, 0, 1, 1], [], []>} : vector<8x32xf32>, vector<32x128xf32>, vector<8x128xf32> -> vector<8x128xf32>
    %73 = arith.addf %71, %72 : vector<8x128xf32>
    %74 = arith.negf %73 : vector<8x128xf32>
    %75 = math.exp %74 : vector<8x128xf32>
    %cst_27 = arith.constant 1.000000e+00 : f32
    %76 = vector.broadcast %cst_27 : f32 to vector<8x128xf32>
    %77 = arith.addf %76, %75 : vector<8x128xf32>
    %78 = arith.divf %76, %77 : vector<8x128xf32>
    %79 = vector.extract_strided_slice %78 {offsets = [0, 0], sizes = [8, 32], strides = [1, 1]} : vector<8x128xf32> to vector<8x32xf32>
    %80 = vector.extract_strided_slice %78 {offsets = [0, 32], sizes = [8, 32], strides = [1, 1]} : vector<8x128xf32> to vector<8x32xf32>
    %81 = vector.extract_strided_slice %78 {offsets = [0, 64], sizes = [8, 32], strides = [1, 1]} : vector<8x128xf32> to vector<8x32xf32>
    %cst_28 = arith.constant 2.000000e+00 : f32
    %82 = vector.broadcast %cst_28 : f32 to vector<8x32xf32>
    %83 = arith.mulf %82, %81 : vector<8x32xf32>
    %cst_29 = arith.constant 1.000000e+00 : f32
    %84 = vector.broadcast %cst_29 : f32 to vector<8x32xf32>
    %85 = arith.subf %83, %84 : vector<8x32xf32>
    %86 = vector.extract_strided_slice %78 {offsets = [0, 96], sizes = [8, 32], strides = [1, 1]} : vector<8x128xf32> to vector<8x32xf32>
    %87 = arith.mulf %80, %44 : vector<8x32xf32>
    %88 = arith.mulf %79, %85 : vector<8x32xf32>
    %89 = arith.addf %87, %88 : vector<8x32xf32>
    %90 = math.tanh %89 : vector<8x32xf32>
    %91 = arith.mulf %86, %90 : vector<8x32xf32>
    %92 = vector.extract_strided_slice %7 {offsets = [2, 0, 0], sizes = [1, 8, 128], strides = [1, 1, 1]} : vector<8x8x128xf32> to vector<1x8x128xf32>
    %93 = vector.shape_cast %92 : vector<1x8x128xf32> to vector<8x128xf32>
    %cst_30 = arith.constant dense<0.000000e+00> : vector<8x128xf32>
    %94 = tpu.matmul %68, %8, %cst_30 {dimension_numbers = #tpu.dot_dimension_numbers<[1], [0], [0], [1], [0, 0, 1, 1], [], []>} : vector<8x32xf32>, vector<32x128xf32>, vector<8x128xf32> -> vector<8x128xf32>
    %95 = arith.addf %93, %94 : vector<8x128xf32>
    %96 = arith.negf %95 : vector<8x128xf32>
    %97 = math.exp %96 : vector<8x128xf32>
    %cst_31 = arith.constant 1.000000e+00 : f32
    %98 = vector.broadcast %cst_31 : f32 to vector<8x128xf32>
    %99 = arith.addf %98, %97 : vector<8x128xf32>
    %100 = arith.divf %98, %99 : vector<8x128xf32>
    %101 = vector.extract_strided_slice %100 {offsets = [0, 0], sizes = [8, 32], strides = [1, 1]} : vector<8x128xf32> to vector<8x32xf32>
    %102 = vector.extract_strided_slice %100 {offsets = [0, 32], sizes = [8, 32], strides = [1, 1]} : vector<8x128xf32> to vector<8x32xf32>
    %103 = vector.extract_strided_slice %100 {offsets = [0, 64], sizes = [8, 32], strides = [1, 1]} : vector<8x128xf32> to vector<8x32xf32>
    %cst_32 = arith.constant 2.000000e+00 : f32
    %104 = vector.broadcast %cst_32 : f32 to vector<8x32xf32>
    %105 = arith.mulf %104, %103 : vector<8x32xf32>
    %cst_33 = arith.constant 1.000000e+00 : f32
    %106 = vector.broadcast %cst_33 : f32 to vector<8x32xf32>
    %107 = arith.subf %105, %106 : vector<8x32xf32>
    %108 = vector.extract_strided_slice %100 {offsets = [0, 96], sizes = [8, 32], strides = [1, 1]} : vector<8x128xf32> to vector<8x32xf32>
    %109 = arith.mulf %102, %66 : vector<8x32xf32>
    %110 = arith.mulf %101, %107 : vector<8x32xf32>
    %111 = arith.addf %109, %110 : vector<8x32xf32>
    %112 = math.tanh %111 : vector<8x32xf32>
    %113 = arith.mulf %108, %112 : vector<8x32xf32>
    %cst_34 = arith.constant dense<0.000000e+00> : vector<8x128xf32>
    %114 = tpu.matmul %113, %10, %cst_34 {dimension_numbers = #tpu.dot_dimension_numbers<[1], [0], [0], [1], [0, 0, 1, 1], [], []>} : vector<8x32xf32>, vector<32x128xf32>, vector<8x128xf32> -> vector<8x128xf32>
    %115 = vector.broadcast %11 : vector<1x128xf32> to vector<8x128xf32>
    %116 = arith.addf %114, %115 : vector<8x128xf32>
    %cst_35 = arith.constant dense<0.000000e+00> : vector<8x128xf32>
    %117 = tpu.matmul %91, %9, %cst_35 {dimension_numbers = #tpu.dot_dimension_numbers<[1], [0], [0], [1], [0, 0, 1, 1], [], []>} : vector<8x32xf32>, vector<32x128xf32>, vector<8x128xf32> -> vector<8x128xf32>
    %118 = arith.addf %116, %117 : vector<8x128xf32>
    %119 = arith.negf %118 : vector<8x128xf32>
    %120 = math.exp %119 : vector<8x128xf32>
    %cst_36 = arith.constant 1.000000e+00 : f32
    %121 = vector.broadcast %cst_36 : f32 to vector<8x128xf32>
    %122 = arith.addf %121, %120 : vector<8x128xf32>
    %123 = arith.divf %121, %122 : vector<8x128xf32>
    %124 = vector.extract_strided_slice %123 {offsets = [0, 0], sizes = [8, 32], strides = [1, 1]} : vector<8x128xf32> to vector<8x32xf32>
    %125 = vector.extract_strided_slice %123 {offsets = [0, 32], sizes = [8, 32], strides = [1, 1]} : vector<8x128xf32> to vector<8x32xf32>
    %126 = vector.extract_strided_slice %123 {offsets = [0, 64], sizes = [8, 32], strides = [1, 1]} : vector<8x128xf32> to vector<8x32xf32>
    %cst_37 = arith.constant 2.000000e+00 : f32
    %127 = vector.broadcast %cst_37 : f32 to vector<8x32xf32>
    %128 = arith.mulf %127, %126 : vector<8x32xf32>
    %cst_38 = arith.constant 1.000000e+00 : f32
    %129 = vector.broadcast %cst_38 : f32 to vector<8x32xf32>
    %130 = arith.subf %128, %129 : vector<8x32xf32>
    %131 = vector.extract_strided_slice %123 {offsets = [0, 96], sizes = [8, 32], strides = [1, 1]} : vector<8x128xf32> to vector<8x32xf32>
    %132 = arith.mulf %125, %89 : vector<8x32xf32>
    %133 = arith.mulf %124, %130 : vector<8x32xf32>
    %134 = arith.addf %132, %133 : vector<8x32xf32>
    %135 = math.tanh %134 : vector<8x32xf32>
    %136 = arith.mulf %131, %135 : vector<8x32xf32>
    %137 = vector.extract_strided_slice %7 {offsets = [3, 0, 0], sizes = [1, 8, 128], strides = [1, 1, 1]} : vector<8x8x128xf32> to vector<1x8x128xf32>
    %138 = vector.shape_cast %137 : vector<1x8x128xf32> to vector<8x128xf32>
    %cst_39 = arith.constant dense<0.000000e+00> : vector<8x128xf32>
    %139 = tpu.matmul %113, %8, %cst_39 {dimension_numbers = #tpu.dot_dimension_numbers<[1], [0], [0], [1], [0, 0, 1, 1], [], []>} : vector<8x32xf32>, vector<32x128xf32>, vector<8x128xf32> -> vector<8x128xf32>
    %140 = arith.addf %138, %139 : vector<8x128xf32>
    %141 = arith.negf %140 : vector<8x128xf32>
    %142 = math.exp %141 : vector<8x128xf32>
    %cst_40 = arith.constant 1.000000e+00 : f32
    %143 = vector.broadcast %cst_40 : f32 to vector<8x128xf32>
    %144 = arith.addf %143, %142 : vector<8x128xf32>
    %145 = arith.divf %143, %144 : vector<8x128xf32>
    %146 = vector.extract_strided_slice %145 {offsets = [0, 0], sizes = [8, 32], strides = [1, 1]} : vector<8x128xf32> to vector<8x32xf32>
    %147 = vector.extract_strided_slice %145 {offsets = [0, 32], sizes = [8, 32], strides = [1, 1]} : vector<8x128xf32> to vector<8x32xf32>
    %148 = vector.extract_strided_slice %145 {offsets = [0, 64], sizes = [8, 32], strides = [1, 1]} : vector<8x128xf32> to vector<8x32xf32>
    %cst_41 = arith.constant 2.000000e+00 : f32
    %149 = vector.broadcast %cst_41 : f32 to vector<8x32xf32>
    %150 = arith.mulf %149, %148 : vector<8x32xf32>
    %cst_42 = arith.constant 1.000000e+00 : f32
    %151 = vector.broadcast %cst_42 : f32 to vector<8x32xf32>
    %152 = arith.subf %150, %151 : vector<8x32xf32>
    %153 = vector.extract_strided_slice %145 {offsets = [0, 96], sizes = [8, 32], strides = [1, 1]} : vector<8x128xf32> to vector<8x32xf32>
    %154 = arith.mulf %147, %111 : vector<8x32xf32>
    %155 = arith.mulf %146, %152 : vector<8x32xf32>
    %156 = arith.addf %154, %155 : vector<8x32xf32>
    %157 = math.tanh %156 : vector<8x32xf32>
    %158 = arith.mulf %153, %157 : vector<8x32xf32>
    %cst_43 = arith.constant dense<0.000000e+00> : vector<8x128xf32>
    %159 = tpu.matmul %158, %10, %cst_43 {dimension_numbers = #tpu.dot_dimension_numbers<[1], [0], [0], [1], [0, 0, 1, 1], [], []>} : vector<8x32xf32>, vector<32x128xf32>, vector<8x128xf32> -> vector<8x128xf32>
    %160 = vector.broadcast %11 : vector<1x128xf32> to vector<8x128xf32>
    %161 = arith.addf %159, %160 : vector<8x128xf32>
    %cst_44 = arith.constant dense<0.000000e+00> : vector<8x128xf32>
    %162 = tpu.matmul %136, %9, %cst_44 {dimension_numbers = #tpu.dot_dimension_numbers<[1], [0], [0], [1], [0, 0, 1, 1], [], []>} : vector<8x32xf32>, vector<32x128xf32>, vector<8x128xf32> -> vector<8x128xf32>
    %163 = arith.addf %161, %162 : vector<8x128xf32>
    %164 = arith.negf %163 : vector<8x128xf32>
    %165 = math.exp %164 : vector<8x128xf32>
    %cst_45 = arith.constant 1.000000e+00 : f32
    %166 = vector.broadcast %cst_45 : f32 to vector<8x128xf32>
    %167 = arith.addf %166, %165 : vector<8x128xf32>
    %168 = arith.divf %166, %167 : vector<8x128xf32>
    %169 = vector.extract_strided_slice %168 {offsets = [0, 0], sizes = [8, 32], strides = [1, 1]} : vector<8x128xf32> to vector<8x32xf32>
    %170 = vector.extract_strided_slice %168 {offsets = [0, 32], sizes = [8, 32], strides = [1, 1]} : vector<8x128xf32> to vector<8x32xf32>
    %171 = vector.extract_strided_slice %168 {offsets = [0, 64], sizes = [8, 32], strides = [1, 1]} : vector<8x128xf32> to vector<8x32xf32>
    %cst_46 = arith.constant 2.000000e+00 : f32
    %172 = vector.broadcast %cst_46 : f32 to vector<8x32xf32>
    %173 = arith.mulf %172, %171 : vector<8x32xf32>
    %cst_47 = arith.constant 1.000000e+00 : f32
    %174 = vector.broadcast %cst_47 : f32 to vector<8x32xf32>
    %175 = arith.subf %173, %174 : vector<8x32xf32>
    %176 = vector.extract_strided_slice %168 {offsets = [0, 96], sizes = [8, 32], strides = [1, 1]} : vector<8x128xf32> to vector<8x32xf32>
    %177 = arith.mulf %170, %134 : vector<8x32xf32>
    %178 = arith.mulf %169, %175 : vector<8x32xf32>
    %179 = arith.addf %177, %178 : vector<8x32xf32>
    %180 = math.tanh %179 : vector<8x32xf32>
    %181 = arith.mulf %176, %180 : vector<8x32xf32>
    %182 = vector.extract_strided_slice %7 {offsets = [4, 0, 0], sizes = [1, 8, 128], strides = [1, 1, 1]} : vector<8x8x128xf32> to vector<1x8x128xf32>
    %183 = vector.shape_cast %182 : vector<1x8x128xf32> to vector<8x128xf32>
    %cst_48 = arith.constant dense<0.000000e+00> : vector<8x128xf32>
    %184 = tpu.matmul %158, %8, %cst_48 {dimension_numbers = #tpu.dot_dimension_numbers<[1], [0], [0], [1], [0, 0, 1, 1], [], []>} : vector<8x32xf32>, vector<32x128xf32>, vector<8x128xf32> -> vector<8x128xf32>
    %185 = arith.addf %183, %184 : vector<8x128xf32>
    %186 = arith.negf %185 : vector<8x128xf32>
    %187 = math.exp %186 : vector<8x128xf32>
    %cst_49 = arith.constant 1.000000e+00 : f32
    %188 = vector.broadcast %cst_49 : f32 to vector<8x128xf32>
    %189 = arith.addf %188, %187 : vector<8x128xf32>
    %190 = arith.divf %188, %189 : vector<8x128xf32>
    %191 = vector.extract_strided_slice %190 {offsets = [0, 0], sizes = [8, 32], strides = [1, 1]} : vector<8x128xf32> to vector<8x32xf32>
    %192 = vector.extract_strided_slice %190 {offsets = [0, 32], sizes = [8, 32], strides = [1, 1]} : vector<8x128xf32> to vector<8x32xf32>
    %193 = vector.extract_strided_slice %190 {offsets = [0, 64], sizes = [8, 32], strides = [1, 1]} : vector<8x128xf32> to vector<8x32xf32>
    %cst_50 = arith.constant 2.000000e+00 : f32
    %194 = vector.broadcast %cst_50 : f32 to vector<8x32xf32>
    %195 = arith.mulf %194, %193 : vector<8x32xf32>
    %cst_51 = arith.constant 1.000000e+00 : f32
    %196 = vector.broadcast %cst_51 : f32 to vector<8x32xf32>
    %197 = arith.subf %195, %196 : vector<8x32xf32>
    %198 = vector.extract_strided_slice %190 {offsets = [0, 96], sizes = [8, 32], strides = [1, 1]} : vector<8x128xf32> to vector<8x32xf32>
    %199 = arith.mulf %192, %156 : vector<8x32xf32>
    %200 = arith.mulf %191, %197 : vector<8x32xf32>
    %201 = arith.addf %199, %200 : vector<8x32xf32>
    %202 = math.tanh %201 : vector<8x32xf32>
    %203 = arith.mulf %198, %202 : vector<8x32xf32>
    %cst_52 = arith.constant dense<0.000000e+00> : vector<8x128xf32>
    %204 = tpu.matmul %203, %10, %cst_52 {dimension_numbers = #tpu.dot_dimension_numbers<[1], [0], [0], [1], [0, 0, 1, 1], [], []>} : vector<8x32xf32>, vector<32x128xf32>, vector<8x128xf32> -> vector<8x128xf32>
    %205 = vector.broadcast %11 : vector<1x128xf32> to vector<8x128xf32>
    %206 = arith.addf %204, %205 : vector<8x128xf32>
    %cst_53 = arith.constant dense<0.000000e+00> : vector<8x128xf32>
    %207 = tpu.matmul %181, %9, %cst_53 {dimension_numbers = #tpu.dot_dimension_numbers<[1], [0], [0], [1], [0, 0, 1, 1], [], []>} : vector<8x32xf32>, vector<32x128xf32>, vector<8x128xf32> -> vector<8x128xf32>
    %208 = arith.addf %206, %207 : vector<8x128xf32>
    %209 = arith.negf %208 : vector<8x128xf32>
    %210 = math.exp %209 : vector<8x128xf32>
    %cst_54 = arith.constant 1.000000e+00 : f32
    %211 = vector.broadcast %cst_54 : f32 to vector<8x128xf32>
    %212 = arith.addf %211, %210 : vector<8x128xf32>
    %213 = arith.divf %211, %212 : vector<8x128xf32>
    %214 = vector.extract_strided_slice %213 {offsets = [0, 0], sizes = [8, 32], strides = [1, 1]} : vector<8x128xf32> to vector<8x32xf32>
    %215 = vector.extract_strided_slice %213 {offsets = [0, 32], sizes = [8, 32], strides = [1, 1]} : vector<8x128xf32> to vector<8x32xf32>
    %216 = vector.extract_strided_slice %213 {offsets = [0, 64], sizes = [8, 32], strides = [1, 1]} : vector<8x128xf32> to vector<8x32xf32>
    %cst_55 = arith.constant 2.000000e+00 : f32
    %217 = vector.broadcast %cst_55 : f32 to vector<8x32xf32>
    %218 = arith.mulf %217, %216 : vector<8x32xf32>
    %cst_56 = arith.constant 1.000000e+00 : f32
    %219 = vector.broadcast %cst_56 : f32 to vector<8x32xf32>
    %220 = arith.subf %218, %219 : vector<8x32xf32>
    %221 = vector.extract_strided_slice %213 {offsets = [0, 96], sizes = [8, 32], strides = [1, 1]} : vector<8x128xf32> to vector<8x32xf32>
    %222 = arith.mulf %215, %179 : vector<8x32xf32>
    %223 = arith.mulf %214, %220 : vector<8x32xf32>
    %224 = arith.addf %222, %223 : vector<8x32xf32>
    %225 = math.tanh %224 : vector<8x32xf32>
    %226 = arith.mulf %221, %225 : vector<8x32xf32>
    %227 = vector.extract_strided_slice %7 {offsets = [5, 0, 0], sizes = [1, 8, 128], strides = [1, 1, 1]} : vector<8x8x128xf32> to vector<1x8x128xf32>
    %228 = vector.shape_cast %227 : vector<1x8x128xf32> to vector<8x128xf32>
    %cst_57 = arith.constant dense<0.000000e+00> : vector<8x128xf32>
    %229 = tpu.matmul %203, %8, %cst_57 {dimension_numbers = #tpu.dot_dimension_numbers<[1], [0], [0], [1], [0, 0, 1, 1], [], []>} : vector<8x32xf32>, vector<32x128xf32>, vector<8x128xf32> -> vector<8x128xf32>
    %230 = arith.addf %228, %229 : vector<8x128xf32>
    %231 = arith.negf %230 : vector<8x128xf32>
    %232 = math.exp %231 : vector<8x128xf32>
    %cst_58 = arith.constant 1.000000e+00 : f32
    %233 = vector.broadcast %cst_58 : f32 to vector<8x128xf32>
    %234 = arith.addf %233, %232 : vector<8x128xf32>
    %235 = arith.divf %233, %234 : vector<8x128xf32>
    %236 = vector.extract_strided_slice %235 {offsets = [0, 0], sizes = [8, 32], strides = [1, 1]} : vector<8x128xf32> to vector<8x32xf32>
    %237 = vector.extract_strided_slice %235 {offsets = [0, 32], sizes = [8, 32], strides = [1, 1]} : vector<8x128xf32> to vector<8x32xf32>
    %238 = vector.extract_strided_slice %235 {offsets = [0, 64], sizes = [8, 32], strides = [1, 1]} : vector<8x128xf32> to vector<8x32xf32>
    %cst_59 = arith.constant 2.000000e+00 : f32
    %239 = vector.broadcast %cst_59 : f32 to vector<8x32xf32>
    %240 = arith.mulf %239, %238 : vector<8x32xf32>
    %cst_60 = arith.constant 1.000000e+00 : f32
    %241 = vector.broadcast %cst_60 : f32 to vector<8x32xf32>
    %242 = arith.subf %240, %241 : vector<8x32xf32>
    %243 = vector.extract_strided_slice %235 {offsets = [0, 96], sizes = [8, 32], strides = [1, 1]} : vector<8x128xf32> to vector<8x32xf32>
    %244 = arith.mulf %237, %201 : vector<8x32xf32>
    %245 = arith.mulf %236, %242 : vector<8x32xf32>
    %246 = arith.addf %244, %245 : vector<8x32xf32>
    %247 = math.tanh %246 : vector<8x32xf32>
    %248 = arith.mulf %243, %247 : vector<8x32xf32>
    %cst_61 = arith.constant dense<0.000000e+00> : vector<8x128xf32>
    %249 = tpu.matmul %248, %10, %cst_61 {dimension_numbers = #tpu.dot_dimension_numbers<[1], [0], [0], [1], [0, 0, 1, 1], [], []>} : vector<8x32xf32>, vector<32x128xf32>, vector<8x128xf32> -> vector<8x128xf32>
    %250 = vector.broadcast %11 : vector<1x128xf32> to vector<8x128xf32>
    %251 = arith.addf %249, %250 : vector<8x128xf32>
    %cst_62 = arith.constant dense<0.000000e+00> : vector<8x128xf32>
    %252 = tpu.matmul %226, %9, %cst_62 {dimension_numbers = #tpu.dot_dimension_numbers<[1], [0], [0], [1], [0, 0, 1, 1], [], []>} : vector<8x32xf32>, vector<32x128xf32>, vector<8x128xf32> -> vector<8x128xf32>
    %253 = arith.addf %251, %252 : vector<8x128xf32>
    %254 = arith.negf %253 : vector<8x128xf32>
    %255 = math.exp %254 : vector<8x128xf32>
    %cst_63 = arith.constant 1.000000e+00 : f32
    %256 = vector.broadcast %cst_63 : f32 to vector<8x128xf32>
    %257 = arith.addf %256, %255 : vector<8x128xf32>
    %258 = arith.divf %256, %257 : vector<8x128xf32>
    %259 = vector.extract_strided_slice %258 {offsets = [0, 0], sizes = [8, 32], strides = [1, 1]} : vector<8x128xf32> to vector<8x32xf32>
    %260 = vector.extract_strided_slice %258 {offsets = [0, 32], sizes = [8, 32], strides = [1, 1]} : vector<8x128xf32> to vector<8x32xf32>
    %261 = vector.extract_strided_slice %258 {offsets = [0, 64], sizes = [8, 32], strides = [1, 1]} : vector<8x128xf32> to vector<8x32xf32>
    %cst_64 = arith.constant 2.000000e+00 : f32
    %262 = vector.broadcast %cst_64 : f32 to vector<8x32xf32>
    %263 = arith.mulf %262, %261 : vector<8x32xf32>
    %cst_65 = arith.constant 1.000000e+00 : f32
    %264 = vector.broadcast %cst_65 : f32 to vector<8x32xf32>
    %265 = arith.subf %263, %264 : vector<8x32xf32>
    %266 = vector.extract_strided_slice %258 {offsets = [0, 96], sizes = [8, 32], strides = [1, 1]} : vector<8x128xf32> to vector<8x32xf32>
    %267 = arith.mulf %260, %224 : vector<8x32xf32>
    %268 = arith.mulf %259, %265 : vector<8x32xf32>
    %269 = arith.addf %267, %268 : vector<8x32xf32>
    %270 = math.tanh %269 : vector<8x32xf32>
    %271 = arith.mulf %266, %270 : vector<8x32xf32>
    %272 = vector.extract_strided_slice %7 {offsets = [6, 0, 0], sizes = [1, 8, 128], strides = [1, 1, 1]} : vector<8x8x128xf32> to vector<1x8x128xf32>
    %273 = vector.shape_cast %272 : vector<1x8x128xf32> to vector<8x128xf32>
    %cst_66 = arith.constant dense<0.000000e+00> : vector<8x128xf32>
    %274 = tpu.matmul %248, %8, %cst_66 {dimension_numbers = #tpu.dot_dimension_numbers<[1], [0], [0], [1], [0, 0, 1, 1], [], []>} : vector<8x32xf32>, vector<32x128xf32>, vector<8x128xf32> -> vector<8x128xf32>
    %275 = arith.addf %273, %274 : vector<8x128xf32>
    %276 = arith.negf %275 : vector<8x128xf32>
    %277 = math.exp %276 : vector<8x128xf32>
    %cst_67 = arith.constant 1.000000e+00 : f32
    %278 = vector.broadcast %cst_67 : f32 to vector<8x128xf32>
    %279 = arith.addf %278, %277 : vector<8x128xf32>
    %280 = arith.divf %278, %279 : vector<8x128xf32>
    %281 = vector.extract_strided_slice %280 {offsets = [0, 0], sizes = [8, 32], strides = [1, 1]} : vector<8x128xf32> to vector<8x32xf32>
    %282 = vector.extract_strided_slice %280 {offsets = [0, 32], sizes = [8, 32], strides = [1, 1]} : vector<8x128xf32> to vector<8x32xf32>
    %283 = vector.extract_strided_slice %280 {offsets = [0, 64], sizes = [8, 32], strides = [1, 1]} : vector<8x128xf32> to vector<8x32xf32>
    %cst_68 = arith.constant 2.000000e+00 : f32
    %284 = vector.broadcast %cst_68 : f32 to vector<8x32xf32>
    %285 = arith.mulf %284, %283 : vector<8x32xf32>
    %cst_69 = arith.constant 1.000000e+00 : f32
    %286 = vector.broadcast %cst_69 : f32 to vector<8x32xf32>
    %287 = arith.subf %285, %286 : vector<8x32xf32>
    %288 = vector.extract_strided_slice %280 {offsets = [0, 96], sizes = [8, 32], strides = [1, 1]} : vector<8x128xf32> to vector<8x32xf32>
    %289 = arith.mulf %282, %246 : vector<8x32xf32>
    %290 = arith.mulf %281, %287 : vector<8x32xf32>
    %291 = arith.addf %289, %290 : vector<8x32xf32>
    %292 = math.tanh %291 : vector<8x32xf32>
    %293 = arith.mulf %288, %292 : vector<8x32xf32>
    %cst_70 = arith.constant dense<0.000000e+00> : vector<8x128xf32>
    %294 = tpu.matmul %293, %10, %cst_70 {dimension_numbers = #tpu.dot_dimension_numbers<[1], [0], [0], [1], [0, 0, 1, 1], [], []>} : vector<8x32xf32>, vector<32x128xf32>, vector<8x128xf32> -> vector<8x128xf32>
    %295 = vector.broadcast %11 : vector<1x128xf32> to vector<8x128xf32>
    %296 = arith.addf %294, %295 : vector<8x128xf32>
    %cst_71 = arith.constant dense<0.000000e+00> : vector<8x128xf32>
    %297 = tpu.matmul %271, %9, %cst_71 {dimension_numbers = #tpu.dot_dimension_numbers<[1], [0], [0], [1], [0, 0, 1, 1], [], []>} : vector<8x32xf32>, vector<32x128xf32>, vector<8x128xf32> -> vector<8x128xf32>
    %298 = arith.addf %296, %297 : vector<8x128xf32>
    %299 = arith.negf %298 : vector<8x128xf32>
    %300 = math.exp %299 : vector<8x128xf32>
    %cst_72 = arith.constant 1.000000e+00 : f32
    %301 = vector.broadcast %cst_72 : f32 to vector<8x128xf32>
    %302 = arith.addf %301, %300 : vector<8x128xf32>
    %303 = arith.divf %301, %302 : vector<8x128xf32>
    %304 = vector.extract_strided_slice %303 {offsets = [0, 0], sizes = [8, 32], strides = [1, 1]} : vector<8x128xf32> to vector<8x32xf32>
    %305 = vector.extract_strided_slice %303 {offsets = [0, 32], sizes = [8, 32], strides = [1, 1]} : vector<8x128xf32> to vector<8x32xf32>
    %306 = vector.extract_strided_slice %303 {offsets = [0, 64], sizes = [8, 32], strides = [1, 1]} : vector<8x128xf32> to vector<8x32xf32>
    %cst_73 = arith.constant 2.000000e+00 : f32
    %307 = vector.broadcast %cst_73 : f32 to vector<8x32xf32>
    %308 = arith.mulf %307, %306 : vector<8x32xf32>
    %cst_74 = arith.constant 1.000000e+00 : f32
    %309 = vector.broadcast %cst_74 : f32 to vector<8x32xf32>
    %310 = arith.subf %308, %309 : vector<8x32xf32>
    %311 = vector.extract_strided_slice %303 {offsets = [0, 96], sizes = [8, 32], strides = [1, 1]} : vector<8x128xf32> to vector<8x32xf32>
    %312 = arith.mulf %305, %269 : vector<8x32xf32>
    %313 = arith.mulf %304, %310 : vector<8x32xf32>
    %314 = arith.addf %312, %313 : vector<8x32xf32>
    %315 = math.tanh %314 : vector<8x32xf32>
    %316 = arith.mulf %311, %315 : vector<8x32xf32>
    %317 = vector.extract_strided_slice %7 {offsets = [7, 0, 0], sizes = [1, 8, 128], strides = [1, 1, 1]} : vector<8x8x128xf32> to vector<1x8x128xf32>
    %318 = vector.shape_cast %317 : vector<1x8x128xf32> to vector<8x128xf32>
    %cst_75 = arith.constant dense<0.000000e+00> : vector<8x128xf32>
    %319 = tpu.matmul %293, %8, %cst_75 {dimension_numbers = #tpu.dot_dimension_numbers<[1], [0], [0], [1], [0, 0, 1, 1], [], []>} : vector<8x32xf32>, vector<32x128xf32>, vector<8x128xf32> -> vector<8x128xf32>
    %320 = arith.addf %318, %319 : vector<8x128xf32>
    %321 = arith.negf %320 : vector<8x128xf32>
    %322 = math.exp %321 : vector<8x128xf32>
    %cst_76 = arith.constant 1.000000e+00 : f32
    %323 = vector.broadcast %cst_76 : f32 to vector<8x128xf32>
    %324 = arith.addf %323, %322 : vector<8x128xf32>
    %325 = arith.divf %323, %324 : vector<8x128xf32>
    %326 = vector.extract_strided_slice %325 {offsets = [0, 0], sizes = [8, 32], strides = [1, 1]} : vector<8x128xf32> to vector<8x32xf32>
    %327 = vector.extract_strided_slice %325 {offsets = [0, 32], sizes = [8, 32], strides = [1, 1]} : vector<8x128xf32> to vector<8x32xf32>
    %328 = vector.extract_strided_slice %325 {offsets = [0, 64], sizes = [8, 32], strides = [1, 1]} : vector<8x128xf32> to vector<8x32xf32>
    %cst_77 = arith.constant 2.000000e+00 : f32
    %329 = vector.broadcast %cst_77 : f32 to vector<8x32xf32>
    %330 = arith.mulf %329, %328 : vector<8x32xf32>
    %cst_78 = arith.constant 1.000000e+00 : f32
    %331 = vector.broadcast %cst_78 : f32 to vector<8x32xf32>
    %332 = arith.subf %330, %331 : vector<8x32xf32>
    %333 = vector.extract_strided_slice %325 {offsets = [0, 96], sizes = [8, 32], strides = [1, 1]} : vector<8x128xf32> to vector<8x32xf32>
    %334 = arith.mulf %327, %291 : vector<8x32xf32>
    %335 = arith.mulf %326, %332 : vector<8x32xf32>
    %336 = arith.addf %334, %335 : vector<8x32xf32>
    %337 = math.tanh %336 : vector<8x32xf32>
    %338 = arith.mulf %333, %337 : vector<8x32xf32>
    %cst_79 = arith.constant dense<0.000000e+00> : vector<8x128xf32>
    %339 = tpu.matmul %338, %10, %cst_79 {dimension_numbers = #tpu.dot_dimension_numbers<[1], [0], [0], [1], [0, 0, 1, 1], [], []>} : vector<8x32xf32>, vector<32x128xf32>, vector<8x128xf32> -> vector<8x128xf32>
    %340 = vector.broadcast %11 : vector<1x128xf32> to vector<8x128xf32>
    %341 = arith.addf %339, %340 : vector<8x128xf32>
    %cst_80 = arith.constant dense<0.000000e+00> : vector<8x128xf32>
    %342 = tpu.matmul %316, %9, %cst_80 {dimension_numbers = #tpu.dot_dimension_numbers<[1], [0], [0], [1], [0, 0, 1, 1], [], []>} : vector<8x32xf32>, vector<32x128xf32>, vector<8x128xf32> -> vector<8x128xf32>
    %343 = arith.addf %341, %342 : vector<8x128xf32>
    %344 = arith.negf %343 : vector<8x128xf32>
    %345 = math.exp %344 : vector<8x128xf32>
    %cst_81 = arith.constant 1.000000e+00 : f32
    %346 = vector.broadcast %cst_81 : f32 to vector<8x128xf32>
    %347 = arith.addf %346, %345 : vector<8x128xf32>
    %348 = arith.divf %346, %347 : vector<8x128xf32>
    %349 = vector.extract_strided_slice %348 {offsets = [0, 0], sizes = [8, 32], strides = [1, 1]} : vector<8x128xf32> to vector<8x32xf32>
    %350 = vector.extract_strided_slice %348 {offsets = [0, 32], sizes = [8, 32], strides = [1, 1]} : vector<8x128xf32> to vector<8x32xf32>
    %351 = vector.extract_strided_slice %348 {offsets = [0, 64], sizes = [8, 32], strides = [1, 1]} : vector<8x128xf32> to vector<8x32xf32>
    %cst_82 = arith.constant 2.000000e+00 : f32
    %352 = vector.broadcast %cst_82 : f32 to vector<8x32xf32>
    %353 = arith.mulf %352, %351 : vector<8x32xf32>
    %cst_83 = arith.constant 1.000000e+00 : f32
    %354 = vector.broadcast %cst_83 : f32 to vector<8x32xf32>
    %355 = arith.subf %353, %354 : vector<8x32xf32>
    %356 = vector.extract_strided_slice %348 {offsets = [0, 96], sizes = [8, 32], strides = [1, 1]} : vector<8x128xf32> to vector<8x32xf32>
    %357 = arith.mulf %350, %314 : vector<8x32xf32>
    %358 = arith.mulf %349, %355 : vector<8x32xf32>
    %359 = arith.addf %357, %358 : vector<8x32xf32>
    %360 = math.tanh %359 : vector<8x32xf32>
    %361 = arith.mulf %356, %360 : vector<8x32xf32>
    %c0_84 = arith.constant 0 : index
    %c0_85 = arith.constant 0 : index
    %362 = vector.load %arg8[%c0_84, %c0_85] : memref<32x128xf32, #tpu.memory_space<vmem>>, vector<32x128xf32>
    %cst_86 = arith.constant dense<0.000000e+00> : vector<8x128xf32>
    %363 = tpu.matmul %361, %362, %cst_86 {dimension_numbers = #tpu.dot_dimension_numbers<[1], [0], [0], [1], [0, 0, 1, 1], [], []>} : vector<8x32xf32>, vector<32x128xf32>, vector<8x128xf32> -> vector<8x128xf32>
    %c0_87 = arith.constant 0 : index
    %c0_88 = arith.constant 0 : index
    %364 = vector.load %arg9[%c0_87, %c0_88] : memref<1x128xf32, #tpu.memory_space<vmem>>, vector<1x128xf32>
    %365 = vector.broadcast %364 : vector<1x128xf32> to vector<8x128xf32>
    %366 = arith.addf %363, %365 : vector<8x128xf32>
    %c0_89 = arith.constant 0 : index
    %c0_90 = arith.constant 0 : index
    %367 = vector.load %arg10[%c0_89, %c0_90] : memref<8x128xf32, #tpu.memory_space<vmem>>, vector<8x128xf32>
    tpu.vector_store %arg10[%c0_89, %c0_90], %366 {strides = array<i32>} : memref<8x128xf32, #tpu.memory_space<vmem>>, vector<8x128xf32>,
    return
  }
  func.func @transform_0(%arg0: i32) -> (i32, i32, i32) {
    %c0_i32 = arith.constant 0 : i32
    %c0_i32_0 = arith.constant 0 : i32
    %c0_i32_1 = arith.constant 0 : i32
    return %c0_i32, %arg0, %c0_i32_0 : i32, i32, i32
  }
  func.func @transform_1(%arg0: i32) -> (i32, i32) {
    %c0_i32 = arith.constant 0 : i32
    %c0_i32_0 = arith.constant 0 : i32
    %c0_i32_1 = arith.constant 0 : i32
    return %c0_i32, %c0_i32_0 : i32, i32
  }
  func.func @transform_2(%arg0: i32) -> (i32, i32) {
    %c0_i32 = arith.constant 0 : i32
    %c0_i32_0 = arith.constant 0 : i32
    %c0_i32_1 = arith.constant 0 : i32
    return %c0_i32, %c0_i32_0 : i32, i32
  }
  func.func @transform_3(%arg0: i32) -> (i32, i32) {
    %c0_i32 = arith.constant 0 : i32
    %c0_i32_0 = arith.constant 0 : i32
    %c0_i32_1 = arith.constant 0 : i32
    return %c0_i32, %c0_i32_0 : i32, i32
  }
  func.func @transform_4(%arg0: i32) -> (i32, i32) {
    %c0_i32 = arith.constant 0 : i32
    %c0_i32_0 = arith.constant 0 : i32
    %c0_i32_1 = arith.constant 0 : i32
    return %c0_i32, %c0_i32_0 : i32, i32
  }
  func.func @transform_5(%arg0: i32) -> (i32, i32) {
    %c0_i32 = arith.constant 0 : i32
    %c0_i32_0 = arith.constant 0 : i32
    %c0_i32_1 = arith.constant 0 : i32
    return %c0_i32, %c0_i32_0 : i32, i32
  }
  func.func @transform_6(%arg0: i32) -> (i32, i32) {
    %c0_i32 = arith.constant 0 : i32
    %c0_i32_0 = arith.constant 0 : i32
    %c0_i32_1 = arith.constant 0 : i32
    return %c0_i32, %c0_i32_0 : i32, i32
  }
  func.func @transform_7(%arg0: i32) -> (i32, i32) {
    %c0_i32 = arith.constant 0 : i32
    %c0_i32_0 = arith.constant 0 : i32
    %c0_i32_1 = arith.constant 0 : i32
    return %c0_i32, %c0_i32_0 : i32, i32
  }
  func.func @transform_8(%arg0: i32) -> (i32, i32) {
    %c0_i32 = arith.constant 0 : i32
    %c0_i32_0 = arith.constant 0 : i32
    %c0_i32_1 = arith.constant 0 : i32
    return %c0_i32, %c0_i32_0 : i32, i32
  }
  func.func @transform_9(%arg0: i32) -> (i32, i32) {
    %c0_i32 = arith.constant 0 : i32
    %c0_i32_0 = arith.constant 0 : i32
    return %arg0, %c0_i32 : i32, i32
  }
}

</mosaic_0001>

<llo_original>
// kernel: my_module_forward.1
$region0: #{my_module_forward.1}
  #allocation0 [shape = 'u32[]', space=smem, size = 0x4, offset = 0x4, fixed_abs, tag = 'smem constant byte address 0x4 - core index']
  #allocation1 [shape = 'u32[144,128]{1,0:T(1,128)}', space=vmem, size = 0x12000, scoped, tag = 'internal scratch']
  %s0 = inlined_call_operand.vmem [shape: f32[8,8,16], index: 0, kind: input, shape index: {}]
  %s1 = inlined_call_operand.vmem [shape: f32[16,128], index: 1, kind: input, shape index: {}]
  %s2 = inlined_call_operand.vmem [shape: f32[32,128], index: 2, kind: input, shape index: {}]
  %s3 = inlined_call_operand.vmem [shape: f32[1,128], index: 3, kind: input, shape index: {}]
  %s4 = inlined_call_operand.vmem [shape: f32[32,128], index: 4, kind: input, shape index: {}]
  %s5 = inlined_call_operand.vmem [shape: f32[32,128], index: 5, kind: input, shape index: {}]
  %s6 = inlined_call_operand.vmem [shape: f32[1,128], index: 6, kind: input, shape index: {}]
  %s7 = inlined_call_operand.hbm [shape: f32[32,128], index: 7, kind: input, shape index: {}]
  %s8 = inlined_call_operand.hbm [shape: f32[1,128], index: 8, kind: input, shape index: {}]
  %s9 = inlined_call_operand.vmem [shape: f32[8,128], index: 9, kind: output, shape index: {}]
  %s10 = sld [smem:[#allocation0]]
  $region54: #{my_module_forward.1} parent=0
    _
  %s12 = ssub.s32 1, %s10
  %s13 = scalar_select 0, %s12, %s10
  $region1: #{my_module_forward.1} parent=0
    #allocation2 [shape = 'u8[16384]{0}', space=vmem, size = 0x4000, scoped, tag = 'input window, operand 7, single buffered']
    #allocation3 [shape = 's32[1]{0}', space=sflag, size = 0x4, scoped, tag = 'scoped memory for my_module_forward.1']
    #allocation4 [shape = 'u8[512]{0}', space=vmem, size = 0x400, scoped, tag = 'input window, operand 8, single buffered']
    #allocation5 [shape = 's32[1]{0}', space=sflag, size = 0x4, scoped, tag = 'scoped memory for my_module_forward.1']
    %14 = vsyncpa [#allocation3], 0
    %15 = vsyncpa [#allocation5], 0
    // Predicated region
    $region2: #{my_module_forward.1} parent=1 // pred_check
      _
    $region3: #{my_module_forward.1} parent=1 // pred_check_branch
      %17 = sbr.rel (0) target = $region5
    $region4: #{my_module_forward.1} parent=1 // pred_region
      _
    $region5: #{my_module_forward.1} parent=1 // pred_fallthru
      _
    // Predicated region
    $region6: #{my_module_forward.1} parent=1 // pred_check
      _
    $region7: #{my_module_forward.1} parent=1 // pred_check_branch
      %19 = sbr.rel (0) target = $region9
    $region8: #{my_module_forward.1} parent=1 // pred_region
      _
    $region9: #{my_module_forward.1} parent=1 // pred_fallthru
      _
    // Predicated region
    $region10: #{my_module_forward.1} parent=1 // pred_check
      _
    $region11: #{my_module_forward.1} parent=1 // pred_check_branch
      %21 = sbr.rel (0) target = $region13
    $region12: #{my_module_forward.1} parent=1 // pred_region
      _
    $region13: #{my_module_forward.1} parent=1 // pred_fallthru
      _
    // Predicated region
    $region14: #{my_module_forward.1} parent=1 // pred_check
      _
    $region15: #{my_module_forward.1} parent=1 // pred_check_branch
      %23 = sbr.rel (0) target = $region17
    $region16: #{my_module_forward.1} parent=1 // pred_region
      _
    $region17: #{my_module_forward.1} parent=1 // pred_fallthru
      _
    // Predicated region
    $region18: #{my_module_forward.1} parent=1 // pred_check
      _
    $region19: #{my_module_forward.1} parent=1 // pred_check_branch
      %25 = sbr.rel (0) target = $region21
    $region20: #{my_module_forward.1} parent=1 // pred_region
      _
    $region21: #{my_module_forward.1} parent=1 // pred_fallthru
      _
    // Predicated region
    $region22: #{my_module_forward.1} parent=1 // pred_check
      _
    $region23: #{my_module_forward.1} parent=1 // pred_check_branch
      %27 = sbr.rel (0) target = $region25
    $region24: #{my_module_forward.1} parent=1 // pred_region
      _
    $region25: #{my_module_forward.1} parent=1 // pred_fallthru
      _
    // Predicated region
    $region26: #{my_module_forward.1} parent=1 // pred_check
      _
    $region27: #{my_module_forward.1} parent=1 // pred_check_branch
      %29 = sbr.rel (0) target = $region29
    $region28: #{my_module_forward.1} parent=1 // pred_region
      _
    $region29: #{my_module_forward.1} parent=1 // pred_fallthru
      _
    // Predicated region
    $region30: #{my_module_forward.1} parent=1 // pred_check
      _
    $region31: #{my_module_forward.1} parent=1 // pred_check_branch
      %31 = sbr.rel (0) target = $region33
    $region32: #{my_module_forward.1} parent=1 // pred_region
      %s33 = ssub.s32 512, 512
      %34 = vsyncadd [#allocation3], %s33
      %s35 = sshll.u32 [#allocation2], 4
      %s36 = int_to_ptr.vmem [resolvable:$true] %s35
      %41 = dma.hbm_to_vmem [thread:$0]  %s7, 512, %s36, [#allocation3], 128, 128, 8
    $region33: #{my_module_forward.1} parent=1 // pred_fallthru
      _
    // Predicated region
    $region34: #{my_module_forward.1} parent=1 // pred_check
      _
    $region35: #{my_module_forward.1} parent=1 // pred_check_branch
      %43 = sbr.rel (0) target = $region37
    $region36: #{my_module_forward.1} parent=1 // pred_region
      %s45 = ssub.s32 16, 16
      %46 = vsyncadd [#allocation5], %s45
      %s48 = sshll.u32 [#allocation4], 4
      %s49 = int_to_ptr.vmem [resolvable:$true] %s48
      %51 = dma.hbm_to_vmem [thread:$0]  %s8, 16, %s49, [#allocation5]
    $region37: #{my_module_forward.1} parent=1 // pred_fallthru
      _
    // Predicated region
    $region38: #{my_module_forward.1} parent=1 // pred_check
      _
    $region39: #{my_module_forward.1} parent=1 // pred_check_branch
      %53 = sbr.rel (0) target = $region41
    $region40: #{my_module_forward.1} parent=1 // pred_region
      %54 = dma.done [#allocation3], 512
    $region41: #{my_module_forward.1} parent=1 // pred_fallthru
      _
    // Predicated region
    $region42: #{my_module_forward.1} parent=1 // pred_check
      _
    $region43: #{my_module_forward.1} parent=1 // pred_check_branch
      %56 = sbr.rel (0) target = $region45
    $region44: #{my_module_forward.1} parent=1 // pred_region
      %57 = dma.done [#allocation5], 16
    $region45: #{my_module_forward.1} parent=1 // pred_fallthru
      _
    %v58 = vld [vmem:[%s0] sm:$0xff]
    %v59 = vld [vmem:[%s0 + $0x8] sm:$0xff]
    %v60 = vld [vmem:[%s0 + $0x10] sm:$0xff]
    %v61 = vld [vmem:[%s0 + $0x18] sm:$0xff]
    %v62 = vld [vmem:[%s0 + $0x20] sm:$0xff]
    %v63 = vld [vmem:[%s0 + $0x28] sm:$0xff]
    %v64 = vld [vmem:[%s0 + $0x30] sm:$0xff]
    %v65 = vld [vmem:[%s0 + $0x38] sm:$0xff]
    %v66 = vld [vmem:[%s1] sm:$0xff]
    %v67 = vld [vmem:[%s1 + $0x8] sm:$0xff]
    %v68 = vld [vmem:[%s3] sm:$0x1]
    %v70 = vlaneseq
    %v71 = vshrl.u32 %v70, 7
    %v72 = vsub.s32 0, %v71
    %v73 = vrot.slane %v68, %v72
    %vm75 = vcmask 130048
    %v77 = vsel %vm75, %v58, 0
    %v80 = vsel %vm75, %v59, 0
    %v83 = vsel %vm75, %v60, 0
    %v86 = vsel %vm75, %v61, 0
    %v89 = vsel %vm75, %v62, 0
    %v92 = vsel %vm75, %v63, 0
    %v95 = vsel %vm75, %v64, 0
    %v98 = vsel %vm75, %v65, 0
    %100 = vmatprep.subr.mxu0 0.0
    %101 = vmatpush1.msra.mxu0 0.0
    %102 = vmatprep.subr.mxu0 0.0
    %103 = vmatpush1.msra.mxu0 0.0
    %104 = vmatprep.subr.mxu0 0.0
    %105 = vmatpush1.msra.mxu0 0.0
    %106 = vmatprep.subr.mxu0 0.0
    %107 = vmatpush1.msra.mxu0 0.0
    %108 = vmatprep.subr.mxu0 0.0
    %109 = vmatpush1.msra.mxu0 0.0
    %110 = vmatprep.subr.mxu0 0.0
    %111 = vmatpush1.msra.mxu0 0.0
    %112 = vmatprep.subr.mxu0 0.0
    %113 = vmatpush1.msra.mxu0 0.0
    %114 = vmatprep.subr.mxu0 0.0
    %115 = vmatpush1.msra.mxu0 0.0
    %116 = vmatprep.subr.mxu0 0.0
    %117 = vmatpush1.msra.mxu0 0.0
    %118 = vmatprep.subr.mxu0 0.0
    %119 = vmatpush1.msra.mxu0 0.0
    %120 = vmatprep.subr.mxu0 0.0
    %121 = vmatpush1.msra.mxu0 0.0
    %122 = vmatprep.subr.mxu0 0.0
    %123 = vmatpush1.msra.mxu0 0.0
    %124 = vmatprep.subr.mxu0 0.0
    %125 = vmatpush1.msra.mxu0 0.0
    %126 = vmatprep.subr.mxu0 0.0
    %127 = vmatpush1.msra.mxu0 0.0
    %128 = vmatprep.subr.mxu0 0.0
    %129 = vmatpush1.msra.mxu0 %v67
    %130 = vmatprep.subr.mxu0 0.0
    %131 = vmatpush1.msra.mxu0 %v66
    %132 = vmatprep.subr.mxu0 0.0
    %133 = vmatpush2.msra.mxu0 0.0
    %134 = vmatprep.subr.mxu0 0.0
    %135 = vmatpush2.msra.mxu0 0.0
    %136 = vmatprep.subr.mxu0 0.0
    %137 = vmatpush2.msra.mxu0 0.0
    %138 = vmatprep.subr.mxu0 0.0
    %139 = vmatpush2.msra.mxu0 0.0
    %140 = vmatprep.subr.mxu0 0.0
    %141 = vmatpush2.msra.mxu0 0.0
    %142 = vmatprep.subr.mxu0 0.0
    %143 = vmatpush2.msra.mxu0 0.0
    %144 = vmatprep.subr.mxu0 0.0
    %145 = vmatpush2.msra.mxu0 0.0
    %146 = vmatprep.subr.mxu0 0.0
    %147 = vmatpush2.msra.mxu0 0.0
    %148 = vmatprep.subr.mxu0 0.0
    %149 = vmatpush2.msra.mxu0 0.0
    %150 = vmatprep.subr.mxu0 0.0
    %151 = vmatpush2.msra.mxu0 0.0
    %152 = vmatprep.subr.mxu0 0.0
    %153 = vmatpush2.msra.mxu0 0.0
    %154 = vmatprep.subr.mxu0 0.0
    %155 = vmatpush2.msra.mxu0 0.0
    %156 = vmatprep.subr.mxu0 0.0
    %157 = vmatpush2.msra.mxu0 0.0
    %158 = vmatprep.subr.mxu0 0.0
    %159 = vmatpush2.msra.mxu0 0.0
    %160 = vmatprep.subr.mxu0 0.0
    %161 = vmatpush2.msra.mxu0 0.0
    %162 = vmatprep.subr.mxu0 0.0
    %163 = vmatpush2.msra.mxu0 0.0
    %164 = vmatprep.mubr.f32.mxu0 0.0
    %165 = vmatmul.mubr.f32.gmra.mxu0 %v77
    %v166 = vpop.f32.mrf.mxu0
    %v167 = vadd.f32 %v73, %v166
    %v168 = vpop.f32.mrf.mxu0
    %169 = vmatprep.mubr.f32.mxu0 0.0
    %170 = vmatmul.mubr.f32.gmra.mxu0 %v80
    %v171 = vpop.f32.mrf.mxu0
    %v172 = vadd.f32 %v73, %v171
    %v173 = vpop.f32.mrf.mxu0
    %174 = vmatprep.mubr.f32.mxu0 0.0
    %175 = vmatmul.mubr.f32.gmra.mxu0 %v83
    %v176 = vpop.f32.mrf.mxu0
    %v177 = vadd.f32 %v73, %v176
    %v178 = vpop.f32.mrf.mxu0
    %179 = vmatprep.mubr.f32.mxu0 0.0
    %180 = vmatmul.mubr.f32.gmra.mxu0 %v86
    %v181 = vpop.f32.mrf.mxu0
    %v182 = vadd.f32 %v73, %v181
    %v183 = vpop.f32.mrf.mxu0
    %184 = vmatprep.mubr.f32.mxu0 0.0
    %185 = vmatmul.mubr.f32.gmra.mxu0 %v89
    %v186 = vpop.f32.mrf.mxu0
    %v187 = vadd.f32 %v73, %v186
    %v188 = vpop.f32.mrf.mxu0
    %189 = vmatprep.mubr.f32.mxu0 0.0
    %190 = vmatmul.mubr.f32.gmra.mxu0 %v92
    %v191 = vpop.f32.mrf.mxu0
    %v192 = vadd.f32 %v73, %v191
    %v193 = vpop.f32.mrf.mxu0
    %194 = vmatprep.mubr.f32.mxu0 0.0
    %195 = vmatmul.mubr.f32.gmra.mxu0 %v95
    %v196 = vpop.f32.mrf.mxu0
    %v197 = vadd.f32 %v73, %v196
    %v198 = vpop.f32.mrf.mxu0
    %199 = vmatprep.mubr.f32.mxu0 0.0
    %200 = vmatmul.mubr.f32.gmra.mxu0 %v98
    %v201 = vpop.f32.mrf.mxu0
    %v202 = vadd.f32 %v73, %v201
    %v203 = vpop.f32.mrf.mxu0
    %204 = vdwg.mxu0
    %v205 = vld [vmem:[%s2] sm:$0xff]
    %v206 = vld [vmem:[%s2 + $0x8] sm:$0xff]
    %v207 = vld [vmem:[%s2 + $0x10] sm:$0xff]
    %v208 = vld [vmem:[%s2 + $0x18] sm:$0xff]
    %v209 = vld [vmem:[%s5] sm:$0xff]
    %v210 = vld [vmem:[%s5 + $0x8] sm:$0xff]
    %v211 = vld [vmem:[%s5 + $0x10] sm:$0xff]
    %v212 = vld [vmem:[%s5 + $0x18] sm:$0xff]
    %v213 = vld [vmem:[%s4] sm:$0xff]
    %v214 = vld [vmem:[%s4 + $0x8] sm:$0xff]
    %v215 = vld [vmem:[%s4 + $0x10] sm:$0xff]
    %v216 = vld [vmem:[%s4 + $0x18] sm:$0xff]
    %v217 = vld [vmem:[%s6] sm:$0x1]
    %v218 = vxor.u32 %v167, 2147483648
    %v219 = vmul.f32 %v218, 1.442695
    %v220 = vpow.pop %v219
    %v221 = vadd.f32 %v220, 1.0
    %v222 = vrcp.pop %v221
    %v223 = vmul.f32 1.0, %v222
    %v224 = vmul.f32 %v223, 2.0
    %v225 = vsub.f32 %v224, 1.0
    %227 = vrot.lane.b32.xlu0 %v225, 64
    %v228 = vpop.permute.xlu0 %227
    %v230 = vmul.f32 %v223, %v228
    %v231 = vtanh.pop %v230
    %233 = vrot.lane.b32.xlu0 %v231, 96
    %v234 = vpop.permute.xlu0 %233
    %v236 = vmul.f32 %v223, %v234
    %v238 = vlaneseq
    %v239 = vshrl.u32 %v238, 7
    %v240 = vsub.s32 0, %v239
    %v241 = vrot.slane %v217, %v240
    %244 = vrot.lane.b32.xlu0 %v236, 32
    %v245 = vpop.permute.xlu0 %244
    %vm246 = vcmask 261120
    %v247 = vsel %vm246, %v245, 0
    %249 = vmatprep.subr.mxu0 0.0
    %250 = vmatpush1.msra.mxu0 0.0
    %251 = vmatprep.subr.mxu0 0.0
    %252 = vmatpush1.msra.mxu0 0.0
    %253 = vmatprep.subr.mxu0 0.0
    %254 = vmatpush1.msra.mxu0 0.0
    %255 = vmatprep.subr.mxu0 0.0
    %256 = vmatpush1.msra.mxu0 0.0
    %257 = vmatprep.subr.mxu0 0.0
    %258 = vmatpush1.msra.mxu0 0.0
    %259 = vmatprep.subr.mxu0 0.0
    %260 = vmatpush1.msra.mxu0 0.0
    %261 = vmatprep.subr.mxu0 0.0
    %262 = vmatpush1.msra.mxu0 0.0
    %263 = vmatprep.subr.mxu0 0.0
    %264 = vmatpush1.msra.mxu0 0.0
    %265 = vmatprep.subr.mxu0 0.0
    %266 = vmatpush1.msra.mxu0 0.0
    %267 = vmatprep.subr.mxu0 0.0
    %268 = vmatpush1.msra.mxu0 0.0
    %269 = vmatprep.subr.mxu0 0.0
    %270 = vmatpush1.msra.mxu0 0.0
    %271 = vmatprep.subr.mxu0 0.0
    %272 = vmatpush1.msra.mxu0 0.0
    %273 = vmatprep.subr.mxu0 0.0
    %274 = vmatpush1.msra.mxu0 %v216
    %275 = vmatprep.subr.mxu0 0.0
    %276 = vmatpush1.msra.mxu0 %v215
    %277 = vmatprep.subr.mxu0 0.0
    %278 = vmatpush1.msra.mxu0 %v214
    %279 = vmatprep.subr.mxu0 0.0
    %280 = vmatpush1.msra.mxu0 %v213
    %281 = vmatprep.subr.mxu0 0.0
    %282 = vmatpush2.msra.mxu0 0.0
    %283 = vmatprep.subr.mxu0 0.0
    %284 = vmatpush2.msra.mxu0 0.0
    %285 = vmatprep.subr.mxu0 0.0
    %286 = vmatpush2.msra.mxu0 0.0
    %287 = vmatprep.subr.mxu0 0.0
    %288 = vmatpush2.msra.mxu0 0.0
    %289 = vmatprep.subr.mxu0 0.0
    %290 = vmatpush2.msra.mxu0 0.0
    %291 = vmatprep.subr.mxu0 0.0
    %292 = vmatpush2.msra.mxu0 0.0
    %293 = vmatprep.subr.mxu0 0.0
    %294 = vmatpush2.msra.mxu0 0.0
    %295 = vmatprep.subr.mxu0 0.0
    %296 = vmatpush2.msra.mxu0 0.0
    %297 = vmatprep.subr.mxu0 0.0
    %298 = vmatpush2.msra.mxu0 0.0
    %299 = vmatprep.subr.mxu0 0.0
    %300 = vmatpush2.msra.mxu0 0.0
    %301 = vmatprep.subr.mxu0 0.0
    %302 = vmatpush2.msra.mxu0 0.0
    %303 = vmatprep.subr.mxu0 0.0
    %304 = vmatpush2.msra.mxu0 0.0
    %305 = vmatprep.subr.mxu0 0.0
    %306 = vmatpush2.msra.mxu0 0.0
    %307 = vmatprep.subr.mxu0 0.0
    %308 = vmatpush2.msra.mxu0 0.0
    %309 = vmatprep.subr.mxu0 0.0
    %310 = vmatpush2.msra.mxu0 0.0
    %311 = vmatprep.subr.mxu0 0.0
    %312 = vmatpush2.msra.mxu0 0.0
    %313 = vmatprep.mubr.f32.mxu0 0.0
    %314 = vmatmul.mubr.f32.gmra.mxu0 %v247
    %v315 = vpop.f32.mrf.mxu0
    %v316 = vadd.f32 %v241, %v315
    %v317 = vpop.f32.mrf.mxu0
    %318 = vdwg.mxu0
    %v319 = vxor.u32 %v316, 2147483648
    %v320 = vmul.f32 %v319, 1.442695
    %v321 = vpow.pop %v320
    %v322 = vadd.f32 %v321, 1.0
    %v323 = vrcp.pop %v322
    %v324 = vmul.f32 1.0, %v323
    %v325 = vmul.f32 %v324, 2.0
    %v326 = vsub.f32 %v325, 1.0
    %328 = vrot.lane.b32.xlu0 %v326, 64
    %v329 = vpop.permute.xlu0 %328
    %v331 = vmul.f32 %v324, %v329
    %v332 = vtanh.pop %v331
    %334 = vrot.lane.b32.xlu0 %v332, 96
    %v335 = vpop.permute.xlu0 %334
    %v337 = vmul.f32 %v324, %v335
    %338 = vmatprep.subr.mxu0 0.0
    %339 = vmatpush1.msra.mxu0 0.0
    %340 = vmatprep.subr.mxu0 0.0
    %341 = vmatpush1.msra.mxu0 0.0
    %342 = vmatprep.subr.mxu0 0.0
    %343 = vmatpush1.msra.mxu0 0.0
    %344 = vmatprep.subr.mxu0 0.0
    %345 = vmatpush1.msra.mxu0 0.0
    %346 = vmatprep.subr.mxu0 0.0
    %347 = vmatpush1.msra.mxu0 0.0
    %348 = vmatprep.subr.mxu0 0.0
    %349 = vmatpush1.msra.mxu0 0.0
    %350 = vmatprep.subr.mxu0 0.0
    %351 = vmatpush1.msra.mxu0 0.0
    %352 = vmatprep.subr.mxu0 0.0
    %353 = vmatpush1.msra.mxu0 0.0
    %354 = vmatprep.subr.mxu0 0.0
    %355 = vmatpush1.msra.mxu0 0.0
    %356 = vmatprep.subr.mxu0 0.0
    %357 = vmatpush1.msra.mxu0 0.0
    %358 = vmatprep.subr.mxu0 0.0
    %359 = vmatpush1.msra.mxu0 0.0
    %360 = vmatprep.subr.mxu0 0.0
    %361 = vmatpush1.msra.mxu0 0.0
    %362 = vmatprep.subr.mxu0 0.0
    %363 = vmatpush1.msra.mxu0 %v208
    %364 = vmatprep.subr.mxu0 0.0
    %365 = vmatpush1.msra.mxu0 %v207
    %366 = vmatprep.subr.mxu0 0.0
    %367 = vmatpush1.msra.mxu0 %v206
    %368 = vmatprep.subr.mxu0 0.0
    %369 = vmatpush1.msra.mxu0 %v205
    %370 = vmatprep.subr.mxu0 0.0
    %371 = vmatpush2.msra.mxu0 0.0
    %372 = vmatprep.subr.mxu0 0.0
    %373 = vmatpush2.msra.mxu0 0.0
    %374 = vmatprep.subr.mxu0 0.0
    %375 = vmatpush2.msra.mxu0 0.0
    %376 = vmatprep.subr.mxu0 0.0
    %377 = vmatpush2.msra.mxu0 0.0
    %378 = vmatprep.subr.mxu0 0.0
    %379 = vmatpush2.msra.mxu0 0.0
    %380 = vmatprep.subr.mxu0 0.0
    %381 = vmatpush2.msra.mxu0 0.0
    %382 = vmatprep.subr.mxu0 0.0
    %383 = vmatpush2.msra.mxu0 0.0
    %384 = vmatprep.subr.mxu0 0.0
    %385 = vmatpush2.msra.mxu0 0.0
    %386 = vmatprep.subr.mxu0 0.0
    %387 = vmatpush2.msra.mxu0 0.0
    %388 = vmatprep.subr.mxu0 0.0
    %389 = vmatpush2.msra.mxu0 0.0
    %390 = vmatprep.subr.mxu0 0.0
    %391 = vmatpush2.msra.mxu0 0.0
    %392 = vmatprep.subr.mxu0 0.0
    %393 = vmatpush2.msra.mxu0 0.0
    %394 = vmatprep.subr.mxu0 0.0
    %395 = vmatpush2.msra.mxu0 0.0
    %396 = vmatprep.subr.mxu0 0.0
    %397 = vmatpush2.msra.mxu0 0.0
    %398 = vmatprep.subr.mxu0 0.0
    %399 = vmatpush2.msra.mxu0 0.0
    %400 = vmatprep.subr.mxu0 0.0
    %401 = vmatpush2.msra.mxu0 0.0
    %402 = vmatprep.mubr.f32.mxu0 0.0
    %403 = vmatmul.mubr.f32.gmra.mxu0 %v247
    %v404 = vpop.f32.mrf.mxu0
    %v405 = vadd.f32 0.0, %v404
    %v406 = vpop.f32.mrf.mxu0
    %407 = vdwg.mxu0
    %v408 = vadd.f32 %v172, %v405
    %v409 = vxor.u32 %v408, 2147483648
    %v410 = vmul.f32 %v409, 1.442695
    %v411 = vpow.pop %v410
    %v412 = vadd.f32 %v411, 1.0
    %v413 = vrcp.pop %v412
    %v414 = vmul.f32 1.0, %v413
    %v415 = vmul.f32 %v414, 2.0
    %v416 = vsub.f32 %v415, 1.0
    %418 = vrot.lane.b32.xlu0 %v230, 32
    %v419 = vpop.permute.xlu0 %418
    %v421 = vmul.f32 %v414, %v419
    %423 = vrot.lane.b32.xlu0 %v416, 64
    %v424 = vpop.permute.xlu0 %423
    %v426 = vmul.f32 %v414, %v424
    %428 = vrot.lane.b32.xlu0 %v426, 32
    %v429 = vpop.permute.xlu0 %428
    %v431 = vadd.f32 %v421, %v429
    %v432 = vtanh.pop %v431
    %434 = vrot.lane.b32.xlu0 %v432, 64
    %v435 = vpop.permute.xlu0 %434
    %v437 = vmul.f32 %v414, %v435
    %439 = vrot.lane.b32.xlu0 %v437, 32
    %v440 = vpop.permute.xlu0 %439
    %v441 = vsel %vm246, %v440, 0
    %443 = vmatprep.subr.mxu0 0.0
    %444 = vmatpush1.msra.mxu0 0.0
    %445 = vmatprep.subr.mxu0 0.0
    %446 = vmatpush1.msra.mxu0 0.0
    %447 = vmatprep.subr.mxu0 0.0
    %448 = vmatpush1.msra.mxu0 0.0
    %449 = vmatprep.subr.mxu0 0.0
    %450 = vmatpush1.msra.mxu0 0.0
    %451 = vmatprep.subr.mxu0 0.0
    %452 = vmatpush1.msra.mxu0 0.0
    %453 = vmatprep.subr.mxu0 0.0
    %454 = vmatpush1.msra.mxu0 0.0
    %455 = vmatprep.subr.mxu0 0.0
    %456 = vmatpush1.msra.mxu0 0.0
    %457 = vmatprep.subr.mxu0 0.0
    %458 = vmatpush1.msra.mxu0 0.0
    %459 = vmatprep.subr.mxu0 0.0
    %460 = vmatpush1.msra.mxu0 0.0
    %461 = vmatprep.subr.mxu0 0.0
    %462 = vmatpush1.msra.mxu0 0.0
    %463 = vmatprep.subr.mxu0 0.0
    %464 = vmatpush1.msra.mxu0 0.0
    %465 = vmatprep.subr.mxu0 0.0
    %466 = vmatpush1.msra.mxu0 0.0
    %467 = vmatprep.subr.mxu0 0.0
    %468 = vmatpush1.msra.mxu0 %v216
    %469 = vmatprep.subr.mxu0 0.0
    %470 = vmatpush1.msra.mxu0 %v215
    %471 = vmatprep.subr.mxu0 0.0
    %472 = vmatpush1.msra.mxu0 %v214
    %473 = vmatprep.subr.mxu0 0.0
    %474 = vmatpush1.msra.mxu0 %v213
    %475 = vmatprep.subr.mxu0 0.0
    %476 = vmatpush2.msra.mxu0 0.0
    %477 = vmatprep.subr.mxu0 0.0
    %478 = vmatpush2.msra.mxu0 0.0
    %479 = vmatprep.subr.mxu0 0.0
    %480 = vmatpush2.msra.mxu0 0.0
    %481 = vmatprep.subr.mxu0 0.0
    %482 = vmatpush2.msra.mxu0 0.0
    %483 = vmatprep.subr.mxu0 0.0
    %484 = vmatpush2.msra.mxu0 0.0
    %485 = vmatprep.subr.mxu0 0.0
    %486 = vmatpush2.msra.mxu0 0.0
    %487 = vmatprep.subr.mxu0 0.0
    %488 = vmatpush2.msra.mxu0 0.0
    %489 = vmatprep.subr.mxu0 0.0
    %490 = vmatpush2.msra.mxu0 0.0
    %491 = vmatprep.subr.mxu0 0.0
    %492 = vmatpush2.msra.mxu0 0.0
    %493 = vmatprep.subr.mxu0 0.0
    %494 = vmatpush2.msra.mxu0 0.0
    %495 = vmatprep.subr.mxu0 0.0
    %496 = vmatpush2.msra.mxu0 0.0
    %497 = vmatprep.subr.mxu0 0.0
    %498 = vmatpush2.msra.mxu0 0.0
    %499 = vmatprep.subr.mxu0 0.0
    %500 = vmatpush2.msra.mxu0 0.0
    %501 = vmatprep.subr.mxu0 0.0
    %502 = vmatpush2.msra.mxu0 0.0
    %503 = vmatprep.subr.mxu0 0.0
    %504 = vmatpush2.msra.mxu0 0.0
    %505 = vmatprep.subr.mxu0 0.0
    %506 = vmatpush2.msra.mxu0 0.0
    %507 = vmatprep.mubr.f32.mxu0 0.0
    %508 = vmatmul.mubr.f32.gmra.mxu0 %v441
    %v509 = vpop.f32.mrf.mxu0
    %v510 = vadd.f32 %v241, %v509
    %v511 = vpop.f32.mrf.mxu0
    %512 = vdwg.mxu0
    %514 = vrot.lane.b32.xlu0 %v337, 32
    %v515 = vpop.permute.xlu0 %514
    %v516 = vsel %vm246, %v515, 0
    %518 = vmatprep.subr.mxu0 0.0
    %519 = vmatpush1.msra.mxu0 0.0
    %520 = vmatprep.subr.mxu0 0.0
    %521 = vmatpush1.msra.mxu0 0.0
    %522 = vmatprep.subr.mxu0 0.0
    %523 = vmatpush1.msra.mxu0 0.0
    %524 = vmatprep.subr.mxu0 0.0
    %525 = vmatpush1.msra.mxu0 0.0
    %526 = vmatprep.subr.mxu0 0.0
    %527 = vmatpush1.msra.mxu0 0.0
    %528 = vmatprep.subr.mxu0 0.0
    %529 = vmatpush1.msra.mxu0 0.0
    %530 = vmatprep.subr.mxu0 0.0
    %531 = vmatpush1.msra.mxu0 0.0
    %532 = vmatprep.subr.mxu0 0.0
    %533 = vmatpush1.msra.mxu0 0.0
    %534 = vmatprep.subr.mxu0 0.0
    %535 = vmatpush1.msra.mxu0 0.0
    %536 = vmatprep.subr.mxu0 0.0
    %537 = vmatpush1.msra.mxu0 0.0
    %538 = vmatprep.subr.mxu0 0.0
    %539 = vmatpush1.msra.mxu0 0.0
    %540 = vmatprep.subr.mxu0 0.0
    %541 = vmatpush1.msra.mxu0 0.0
    %542 = vmatprep.subr.mxu0 0.0
    %543 = vmatpush1.msra.mxu0 %v212
    %544 = vmatprep.subr.mxu0 0.0
    %545 = vmatpush1.msra.mxu0 %v211
    %546 = vmatprep.subr.mxu0 0.0
    %547 = vmatpush1.msra.mxu0 %v210
    %548 = vmatprep.subr.mxu0 0.0
    %549 = vmatpush1.msra.mxu0 %v209
    %550 = vmatprep.subr.mxu0 0.0
    %551 = vmatpush2.msra.mxu0 0.0
    %552 = vmatprep.subr.mxu0 0.0
    %553 = vmatpush2.msra.mxu0 0.0
    %554 = vmatprep.subr.mxu0 0.0
    %555 = vmatpush2.msra.mxu0 0.0
    %556 = vmatprep.subr.mxu0 0.0
    %557 = vmatpush2.msra.mxu0 0.0
    %558 = vmatprep.subr.mxu0 0.0
    %559 = vmatpush2.msra.mxu0 0.0
    %560 = vmatprep.subr.mxu0 0.0
    %561 = vmatpush2.msra.mxu0 0.0
    %562 = vmatprep.subr.mxu0 0.0
    %563 = vmatpush2.msra.mxu0 0.0
    %564 = vmatprep.subr.mxu0 0.0
    %565 = vmatpush2.msra.mxu0 0.0
    %566 = vmatprep.subr.mxu0 0.0
    %567 = vmatpush2.msra.mxu0 0.0
    %568 = vmatprep.subr.mxu0 0.0
    %569 = vmatpush2.msra.mxu0 0.0
    %570 = vmatprep.subr.mxu0 0.0
    %571 = vmatpush2.msra.mxu0 0.0
    %572 = vmatprep.subr.mxu0 0.0
    %573 = vmatpush2.msra.mxu0 0.0
    %574 = vmatprep.subr.mxu0 0.0
    %575 = vmatpush2.msra.mxu0 0.0
    %576 = vmatprep.subr.mxu0 0.0
    %577 = vmatpush2.msra.mxu0 0.0
    %578 = vmatprep.subr.mxu0 0.0
    %579 = vmatpush2.msra.mxu0 0.0
    %580 = vmatprep.subr.mxu0 0.0
    %581 = vmatpush2.msra.mxu0 0.0
    %582 = vmatprep.mubr.f32.mxu0 0.0
    %583 = vmatmul.mubr.f32.gmra.mxu0 %v516
    %v584 = vpop.f32.mrf.mxu0
    %v585 = vadd.f32 0.0, %v584
    %v586 = vpop.f32.mrf.mxu0
    %587 = vdwg.mxu0
    %v588 = vadd.f32 %v510, %v585
    %v589 = vxor.u32 %v588, 2147483648
    %v590 = vmul.f32 %v589, 1.442695
    %v591 = vpow.pop %v590
    %v592 = vadd.f32 %v591, 1.0
    %v593 = vrcp.pop %v592
    %v594 = vmul.f32 1.0, %v593
    %v595 = vmul.f32 %v594, 2.0
    %v596 = vsub.f32 %v595, 1.0
    %598 = vrot.lane.b32.xlu0 %v331, 32
    %v599 = vpop.permute.xlu0 %598
    %v601 = vmul.f32 %v594, %v599
    %603 = vrot.lane.b32.xlu0 %v596, 64
    %v604 = vpop.permute.xlu0 %603
    %v606 = vmul.f32 %v594, %v604
    %608 = vrot.lane.b32.xlu0 %v606, 32
    %v609 = vpop.permute.xlu0 %608
    %v611 = vadd.f32 %v601, %v609
    %v612 = vtanh.pop %v611
    %614 = vrot.lane.b32.xlu0 %v612, 64
    %v615 = vpop.permute.xlu0 %614
    %v617 = vmul.f32 %v594, %v615
    %618 = vmatprep.subr.mxu0 0.0
    %619 = vmatpush1.msra.mxu0 0.0
    %620 = vmatprep.subr.mxu0 0.0
    %621 = vmatpush1.msra.mxu0 0.0
    %622 = vmatprep.subr.mxu0 0.0
    %623 = vmatpush1.msra.mxu0 0.0
    %624 = vmatprep.subr.mxu0 0.0
    %625 = vmatpush1.msra.mxu0 0.0
    %626 = vmatprep.subr.mxu0 0.0
    %627 = vmatpush1.msra.mxu0 0.0
    %628 = vmatprep.subr.mxu0 0.0
    %629 = vmatpush1.msra.mxu0 0.0
    %630 = vmatprep.subr.mxu0 0.0
    %631 = vmatpush1.msra.mxu0 0.0
    %632 = vmatprep.subr.mxu0 0.0
    %633 = vmatpush1.msra.mxu0 0.0
    %634 = vmatprep.subr.mxu0 0.0
    %635 = vmatpush1.msra.mxu0 0.0
    %636 = vmatprep.subr.mxu0 0.0
    %637 = vmatpush1.msra.mxu0 0.0
    %638 = vmatprep.subr.mxu0 0.0
    %639 = vmatpush1.msra.mxu0 0.0
    %640 = vmatprep.subr.mxu0 0.0
    %641 = vmatpush1.msra.mxu0 0.0
    %642 = vmatprep.subr.mxu0 0.0
    %643 = vmatpush1.msra.mxu0 %v208
    %644 = vmatprep.subr.mxu0 0.0
    %645 = vmatpush1.msra.mxu0 %v207
    %646 = vmatprep.subr.mxu0 0.0
    %647 = vmatpush1.msra.mxu0 %v206
    %648 = vmatprep.subr.mxu0 0.0
    %649 = vmatpush1.msra.mxu0 %v205
    %650 = vmatprep.subr.mxu0 0.0
    %651 = vmatpush2.msra.mxu0 0.0
    %652 = vmatprep.subr.mxu0 0.0
    %653 = vmatpush2.msra.mxu0 0.0
    %654 = vmatprep.subr.mxu0 0.0
    %655 = vmatpush2.msra.mxu0 0.0
    %656 = vmatprep.subr.mxu0 0.0
    %657 = vmatpush2.msra.mxu0 0.0
    %658 = vmatprep.subr.mxu0 0.0
    %659 = vmatpush2.msra.mxu0 0.0
    %660 = vmatprep.subr.mxu0 0.0
    %661 = vmatpush2.msra.mxu0 0.0
    %662 = vmatprep.subr.mxu0 0.0
    %663 = vmatpush2.msra.mxu0 0.0
    %664 = vmatprep.subr.mxu0 0.0
    %665 = vmatpush2.msra.mxu0 0.0
    %666 = vmatprep.subr.mxu0 0.0
    %667 = vmatpush2.msra.mxu0 0.0
    %668 = vmatprep.subr.mxu0 0.0
    %669 = vmatpush2.msra.mxu0 0.0
    %670 = vmatprep.subr.mxu0 0.0
    %671 = vmatpush2.msra.mxu0 0.0
    %672 = vmatprep.subr.mxu0 0.0
    %673 = vmatpush2.msra.mxu0 0.0
    %674 = vmatprep.subr.mxu0 0.0
    %675 = vmatpush2.msra.mxu0 0.0
    %676 = vmatprep.subr.mxu0 0.0
    %677 = vmatpush2.msra.mxu0 0.0
    %678 = vmatprep.subr.mxu0 0.0
    %679 = vmatpush2.msra.mxu0 0.0
    %680 = vmatprep.subr.mxu0 0.0
    %681 = vmatpush2.msra.mxu0 0.0
    %682 = vmatprep.mubr.f32.mxu0 0.0
    %683 = vmatmul.mubr.f32.gmra.mxu0 %v441
    %v684 = vpop.f32.mrf.mxu0
    %v685 = vadd.f32 0.0, %v684
    %v686 = vpop.f32.mrf.mxu0
    %687 = vdwg.mxu0
    %v688 = vadd.f32 %v177, %v685
    %v689 = vxor.u32 %v688, 2147483648
    %v690 = vmul.f32 %v689, 1.442695
    %v691 = vpow.pop %v690
    %v692 = vadd.f32 %v691, 1.0
    %v693 = vrcp.pop %v692
    %v694 = vmul.f32 1.0, %v693
    %v695 = vmul.f32 %v694, 2.0
    %v696 = vsub.f32 %v695, 1.0
    %v697 = vmul.f32 %v694, %v431
    %699 = vrot.lane.b32.xlu0 %v696, 64
    %v700 = vpop.permute.xlu0 %699
    %v702 = vmul.f32 %v694, %v700
    %704 = vrot.lane.b32.xlu0 %v702, 32
    %v705 = vpop.permute.xlu0 %704
    %v707 = vadd.f32 %v697, %v705
    %v708 = vtanh.pop %v707
    %710 = vrot.lane.b32.xlu0 %v708, 64
    %v711 = vpop.permute.xlu0 %710
    %v713 = vmul.f32 %v694, %v711
    %715 = vrot.lane.b32.xlu0 %v713, 32
    %v716 = vpop.permute.xlu0 %715
    %v717 = vsel %vm246, %v716, 0
    %719 = vmatprep.subr.mxu0 0.0
    %720 = vmatpush1.msra.mxu0 0.0
    %721 = vmatprep.subr.mxu0 0.0
    %722 = vmatpush1.msra.mxu0 0.0
    %723 = vmatprep.subr.mxu0 0.0
    %724 = vmatpush1.msra.mxu0 0.0
    %725 = vmatprep.subr.mxu0 0.0
    %726 = vmatpush1.msra.mxu0 0.0
    %727 = vmatprep.subr.mxu0 0.0
    %728 = vmatpush1.msra.mxu0 0.0
    %729 = vmatprep.subr.mxu0 0.0
    %730 = vmatpush1.msra.mxu0 0.0
    %731 = vmatprep.subr.mxu0 0.0
    %732 = vmatpush1.msra.mxu0 0.0
    %733 = vmatprep.subr.mxu0 0.0
    %734 = vmatpush1.msra.mxu0 0.0
    %735 = vmatprep.subr.mxu0 0.0
    %736 = vmatpush1.msra.mxu0 0.0
    %737 = vmatprep.subr.mxu0 0.0
    %738 = vmatpush1.msra.mxu0 0.0
    %739 = vmatprep.subr.mxu0 0.0
    %740 = vmatpush1.msra.mxu0 0.0
    %741 = vmatprep.subr.mxu0 0.0
    %742 = vmatpush1.msra.mxu0 0.0
    %743 = vmatprep.subr.mxu0 0.0
    %744 = vmatpush1.msra.mxu0 %v216
    %745 = vmatprep.subr.mxu0 0.0
    %746 = vmatpush1.msra.mxu0 %v215
    %747 = vmatprep.subr.mxu0 0.0
    %748 = vmatpush1.msra.mxu0 %v214
    %749 = vmatprep.subr.mxu0 0.0
    %750 = vmatpush1.msra.mxu0 %v213
    %751 = vmatprep.subr.mxu0 0.0
    %752 = vmatpush2.msra.mxu0 0.0
    %753 = vmatprep.subr.mxu0 0.0
    %754 = vmatpush2.msra.mxu0 0.0
    %755 = vmatprep.subr.mxu0 0.0
    %756 = vmatpush2.msra.mxu0 0.0
    %757 = vmatprep.subr.mxu0 0.0
    %758 = vmatpush2.msra.mxu0 0.0
    %759 = vmatprep.subr.mxu0 0.0
    %760 = vmatpush2.msra.mxu0 0.0
    %761 = vmatprep.subr.mxu0 0.0
    %762 = vmatpush2.msra.mxu0 0.0
    %763 = vmatprep.subr.mxu0 0.0
    %764 = vmatpush2.msra.mxu0 0.0
    %765 = vmatprep.subr.mxu0 0.0
    %766 = vmatpush2.msra.mxu0 0.0
    %767 = vmatprep.subr.mxu0 0.0
    %768 = vmatpush2.msra.mxu0 0.0
    %769 = vmatprep.subr.mxu0 0.0
    %770 = vmatpush2.msra.mxu0 0.0
    %771 = vmatprep.subr.mxu0 0.0
    %772 = vmatpush2.msra.mxu0 0.0
    %773 = vmatprep.subr.mxu0 0.0
    %774 = vmatpush2.msra.mxu0 0.0
    %775 = vmatprep.subr.mxu0 0.0
    %776 = vmatpush2.msra.mxu0 0.0
    %777 = vmatprep.subr.mxu0 0.0
    %778 = vmatpush2.msra.mxu0 0.0
    %779 = vmatprep.subr.mxu0 0.0
    %780 = vmatpush2.msra.mxu0 0.0
    %781 = vmatprep.subr.mxu0 0.0
    %782 = vmatpush2.msra.mxu0 0.0
    %783 = vmatprep.mubr.f32.mxu0 0.0
    %784 = vmatmul.mubr.f32.gmra.mxu0 %v717
    %v785 = vpop.f32.mrf.mxu0
    %v786 = vadd.f32 %v241, %v785
    %v787 = vpop.f32.mrf.mxu0
    %788 = vdwg.mxu0
    %790 = vrot.lane.b32.xlu0 %v617, 32
    %v791 = vpop.permute.xlu0 %790
    %v792 = vsel %vm246, %v791, 0
    %794 = vmatprep.subr.mxu0 0.0
    %795 = vmatpush1.msra.mxu0 0.0
    %796 = vmatprep.subr.mxu0 0.0
    %797 = vmatpush1.msra.mxu0 0.0
    %798 = vmatprep.subr.mxu0 0.0
    %799 = vmatpush1.msra.mxu0 0.0
    %800 = vmatprep.subr.mxu0 0.0
    %801 = vmatpush1.msra.mxu0 0.0
    %802 = vmatprep.subr.mxu0 0.0
    %803 = vmatpush1.msra.mxu0 0.0
    %804 = vmatprep.subr.mxu0 0.0
    %805 = vmatpush1.msra.mxu0 0.0
    %806 = vmatprep.subr.mxu0 0.0
    %807 = vmatpush1.msra.mxu0 0.0
    %808 = vmatprep.subr.mxu0 0.0
    %809 = vmatpush1.msra.mxu0 0.0
    %810 = vmatprep.subr.mxu0 0.0
    %811 = vmatpush1.msra.mxu0 0.0
    %812 = vmatprep.subr.mxu0 0.0
    %813 = vmatpush1.msra.mxu0 0.0
    %814 = vmatprep.subr.mxu0 0.0
    %815 = vmatpush1.msra.mxu0 0.0
    %816 = vmatprep.subr.mxu0 0.0
    %817 = vmatpush1.msra.mxu0 0.0
    %818 = vmatprep.subr.mxu0 0.0
    %819 = vmatpush1.msra.mxu0 %v212
    %820 = vmatprep.subr.mxu0 0.0
    %821 = vmatpush1.msra.mxu0 %v211
    %822 = vmatprep.subr.mxu0 0.0
    %823 = vmatpush1.msra.mxu0 %v210
    %824 = vmatprep.subr.mxu0 0.0
    %825 = vmatpush1.msra.mxu0 %v209
    %826 = vmatprep.subr.mxu0 0.0
    %827 = vmatpush2.msra.mxu0 0.0
    %828 = vmatprep.subr.mxu0 0.0
    %829 = vmatpush2.msra.mxu0 0.0
    %830 = vmatprep.subr.mxu0 0.0
    %831 = vmatpush2.msra.mxu0 0.0
    %832 = vmatprep.subr.mxu0 0.0
    %833 = vmatpush2.msra.mxu0 0.0
    %834 = vmatprep.subr.mxu0 0.0
    %835 = vmatpush2.msra.mxu0 0.0
    %836 = vmatprep.subr.mxu0 0.0
    %837 = vmatpush2.msra.mxu0 0.0
    %838 = vmatprep.subr.mxu0 0.0
    %839 = vmatpush2.msra.mxu0 0.0
    %840 = vmatprep.subr.mxu0 0.0
    %841 = vmatpush2.msra.mxu0 0.0
    %842 = vmatprep.subr.mxu0 0.0
    %843 = vmatpush2.msra.mxu0 0.0
    %844 = vmatprep.subr.mxu0 0.0
    %845 = vmatpush2.msra.mxu0 0.0
    %846 = vmatprep.subr.mxu0 0.0
    %847 = vmatpush2.msra.mxu0 0.0
    %848 = vmatprep.subr.mxu0 0.0
    %849 = vmatpush2.msra.mxu0 0.0
    %850 = vmatprep.subr.mxu0 0.0
    %851 = vmatpush2.msra.mxu0 0.0
    %852 = vmatprep.subr.mxu0 0.0
    %853 = vmatpush2.msra.mxu0 0.0
    %854 = vmatprep.subr.mxu0 0.0
    %855 = vmatpush2.msra.mxu0 0.0
    %856 = vmatprep.subr.mxu0 0.0
    %857 = vmatpush2.msra.mxu0 0.0
    %858 = vmatprep.mubr.f32.mxu0 0.0
    %859 = vmatmul.mubr.f32.gmra.mxu0 %v792
    %v860 = vpop.f32.mrf.mxu0
    %v861 = vadd.f32 0.0, %v860
    %v862 = vpop.f32.mrf.mxu0
    %863 = vdwg.mxu0
    %v864 = vadd.f32 %v786, %v861
    %v865 = vxor.u32 %v864, 2147483648
    %v866 = vmul.f32 %v865, 1.442695
    %v867 = vpow.pop %v866
    %v868 = vadd.f32 %v867, 1.0
    %v869 = vrcp.pop %v868
    %v870 = vmul.f32 1.0, %v869
    %v871 = vmul.f32 %v870, 2.0
    %v872 = vsub.f32 %v871, 1.0
    %v873 = vmul.f32 %v870, %v611
    %875 = vrot.lane.b32.xlu0 %v872, 64
    %v876 = vpop.permute.xlu0 %875
    %v878 = vmul.f32 %v870, %v876
    %880 = vrot.lane.b32.xlu0 %v878, 32
    %v881 = vpop.permute.xlu0 %880
    %v883 = vadd.f32 %v873, %v881
    %v884 = vtanh.pop %v883
    %886 = vrot.lane.b32.xlu0 %v884, 64
    %v887 = vpop.permute.xlu0 %886
    %v889 = vmul.f32 %v870, %v887
    %890 = vmatprep.subr.mxu0 0.0
    %891 = vmatpush1.msra.mxu0 0.0
    %892 = vmatprep.subr.mxu0 0.0
    %893 = vmatpush1.msra.mxu0 0.0
    %894 = vmatprep.subr.mxu0 0.0
    %895 = vmatpush1.msra.mxu0 0.0
    %896 = vmatprep.subr.mxu0 0.0
    %897 = vmatpush1.msra.mxu0 0.0
    %898 = vmatprep.subr.mxu0 0.0
    %899 = vmatpush1.msra.mxu0 0.0
    %900 = vmatprep.subr.mxu0 0.0
    %901 = vmatpush1.msra.mxu0 0.0
    %902 = vmatprep.subr.mxu0 0.0
    %903 = vmatpush1.msra.mxu0 0.0
    %904 = vmatprep.subr.mxu0 0.0
    %905 = vmatpush1.msra.mxu0 0.0
    %906 = vmatprep.subr.mxu0 0.0
    %907 = vmatpush1.msra.mxu0 0.0
    %908 = vmatprep.subr.mxu0 0.0
    %909 = vmatpush1.msra.mxu0 0.0
    %910 = vmatprep.subr.mxu0 0.0
    %911 = vmatpush1.msra.mxu0 0.0
    %912 = vmatprep.subr.mxu0 0.0
    %913 = vmatpush1.msra.mxu0 0.0
    %914 = vmatprep.subr.mxu0 0.0
    %915 = vmatpush1.msra.mxu0 %v208
    %916 = vmatprep.subr.mxu0 0.0
    %917 = vmatpush1.msra.mxu0 %v207
    %918 = vmatprep.subr.mxu0 0.0
    %919 = vmatpush1.msra.mxu0 %v206
    %920 = vmatprep.subr.mxu0 0.0
    %921 = vmatpush1.msra.mxu0 %v205
    %922 = vmatprep.subr.mxu0 0.0
    %923 = vmatpush2.msra.mxu0 0.0
    %924 = vmatprep.subr.mxu0 0.0
    %925 = vmatpush2.msra.mxu0 0.0
    %926 = vmatprep.subr.mxu0 0.0
    %927 = vmatpush2.msra.mxu0 0.0
    %928 = vmatprep.subr.mxu0 0.0
    %929 = vmatpush2.msra.mxu0 0.0
    %930 = vmatprep.subr.mxu0 0.0
    %931 = vmatpush2.msra.mxu0 0.0
    %932 = vmatprep.subr.mxu0 0.0
    %933 = vmatpush2.msra.mxu0 0.0
    %934 = vmatprep.subr.mxu0 0.0
    %935 = vmatpush2.msra.mxu0 0.0
    %936 = vmatprep.subr.mxu0 0.0
    %937 = vmatpush2.msra.mxu0 0.0
    %938 = vmatprep.subr.mxu0 0.0
    %939 = vmatpush2.msra.mxu0 0.0
    %940 = vmatprep.subr.mxu0 0.0
    %941 = vmatpush2.msra.mxu0 0.0
    %942 = vmatprep.subr.mxu0 0.0
    %943 = vmatpush2.msra.mxu0 0.0
    %944 = vmatprep.subr.mxu0 0.0
    %945 = vmatpush2.msra.mxu0 0.0
    %946 = vmatprep.subr.mxu0 0.0
    %947 = vmatpush2.msra.mxu0 0.0
    %948 = vmatprep.subr.mxu0 0.0
    %949 = vmatpush2.msra.mxu0 0.0
    %950 = vmatprep.subr.mxu0 0.0
    %951 = vmatpush2.msra.mxu0 0.0
    %952 = vmatprep.subr.mxu0 0.0
    %953 = vmatpush2.msra.mxu0 0.0
    %954 = vmatprep.mubr.f32.mxu0 0.0
    %955 = vmatmul.mubr.f32.gmra.mxu0 %v717
    %v956 = vpop.f32.mrf.mxu0
    %v957 = vadd.f32 0.0, %v956
    %v958 = vpop.f32.mrf.mxu0
    %959 = vdwg.mxu0
    %v960 = vadd.f32 %v182, %v957
    %v961 = vxor.u32 %v960, 2147483648
    %v962 = vmul.f32 %v961, 1.442695
    %v963 = vpow.pop %v962
    %v964 = vadd.f32 %v963, 1.0
    %v965 = vrcp.pop %v964
    %v966 = vmul.f32 1.0, %v965
    %v967 = vmul.f32 %v966, 2.0
    %v968 = vsub.f32 %v967, 1.0
    %v969 = vmul.f32 %v966, %v707
    %971 = vrot.lane.b32.xlu0 %v968, 64
    %v972 = vpop.permute.xlu0 %971
    %v974 = vmul.f32 %v966, %v972
    %976 = vrot.lane.b32.xlu0 %v974, 32
    %v977 = vpop.permute.xlu0 %976
    %v979 = vadd.f32 %v969, %v977
    %v980 = vtanh.pop %v979
    %982 = vrot.lane.b32.xlu0 %v980, 64
    %v983 = vpop.permute.xlu0 %982
    %v985 = vmul.f32 %v966, %v983
    %987 = vrot.lane.b32.xlu0 %v985, 32
    %v988 = vpop.permute.xlu0 %987
    %v989 = vsel %vm246, %v988, 0
    %991 = vmatprep.subr.mxu0 0.0
    %992 = vmatpush1.msra.mxu0 0.0
    %993 = vmatprep.subr.mxu0 0.0
    %994 = vmatpush1.msra.mxu0 0.0
    %995 = vmatprep.subr.mxu0 0.0
    %996 = vmatpush1.msra.mxu0 0.0
    %997 = vmatprep.subr.mxu0 0.0
    %998 = vmatpush1.msra.mxu0 0.0
    %999 = vmatprep.subr.mxu0 0.0
    %1000 = vmatpush1.msra.mxu0 0.0
    %1001 = vmatprep.subr.mxu0 0.0
    %1002 = vmatpush1.msra.mxu0 0.0
    %1003 = vmatprep.subr.mxu0 0.0
    %1004 = vmatpush1.msra.mxu0 0.0
    %1005 = vmatprep.subr.mxu0 0.0
    %1006 = vmatpush1.msra.mxu0 0.0
    %1007 = vmatprep.subr.mxu0 0.0
    %1008 = vmatpush1.msra.mxu0 0.0
    %1009 = vmatprep.subr.mxu0 0.0
    %1010 = vmatpush1.msra.mxu0 0.0
    %1011 = vmatprep.subr.mxu0 0.0
    %1012 = vmatpush1.msra.mxu0 0.0
    %1013 = vmatprep.subr.mxu0 0.0
    %1014 = vmatpush1.msra.mxu0 0.0
    %1015 = vmatprep.subr.mxu0 0.0
    %1016 = vmatpush1.msra.mxu0 %v216
    %1017 = vmatprep.subr.mxu0 0.0
    %1018 = vmatpush1.msra.mxu0 %v215
    %1019 = vmatprep.subr.mxu0 0.0
    %1020 = vmatpush1.msra.mxu0 %v214
    %1021 = vmatprep.subr.mxu0 0.0
    %1022 = vmatpush1.msra.mxu0 %v213
    %1023 = vmatprep.subr.mxu0 0.0
    %1024 = vmatpush2.msra.mxu0 0.0
    %1025 = vmatprep.subr.mxu0 0.0
    %1026 = vmatpush2.msra.mxu0 0.0
    %1027 = vmatprep.subr.mxu0 0.0
    %1028 = vmatpush2.msra.mxu0 0.0
    %1029 = vmatprep.subr.mxu0 0.0
    %1030 = vmatpush2.msra.mxu0 0.0
    %1031 = vmatprep.subr.mxu0 0.0
    %1032 = vmatpush2.msra.mxu0 0.0
    %1033 = vmatprep.subr.mxu0 0.0
    %1034 = vmatpush2.msra.mxu0 0.0
    %1035 = vmatprep.subr.mxu0 0.0
    %1036 = vmatpush2.msra.mxu0 0.0
    %1037 = vmatprep.subr.mxu0 0.0
    %1038 = vmatpush2.msra.mxu0 0.0
    %1039 = vmatprep.subr.mxu0 0.0
    %1040 = vmatpush2.msra.mxu0 0.0
    %1041 = vmatprep.subr.mxu0 0.0
    %1042 = vmatpush2.msra.mxu0 0.0
    %1043 = vmatprep.subr.mxu0 0.0
    %1044 = vmatpush2.msra.mxu0 0.0
    %1045 = vmatprep.subr.mxu0 0.0
    %1046 = vmatpush2.msra.mxu0 0.0
    %1047 = vmatprep.subr.mxu0 0.0
    %1048 = vmatpush2.msra.mxu0 0.0
    %1049 = vmatprep.subr.mxu0 0.0
    %1050 = vmatpush2.msra.mxu0 0.0
    %1051 = vmatprep.subr.mxu0 0.0
    %1052 = vmatpush2.msra.mxu0 0.0
    %1053 = vmatprep.subr.mxu0 0.0
    %1054 = vmatpush2.msra.mxu0 0.0
    %1055 = vmatprep.mubr.f32.mxu0 0.0
    %1056 = vmatmul.mubr.f32.gmra.mxu0 %v989
    %v1057 = vpop.f32.mrf.mxu0
    %v1058 = vadd.f32 %v241, %v1057
    %v1059 = vpop.f32.mrf.mxu0
    %1060 = vdwg.mxu0
    %1062 = vrot.lane.b32.xlu0 %v889, 32
    %v1063 = vpop.permute.xlu0 %1062
    %v1064 = vsel %vm246, %v1063, 0
    %1066 = vmatprep.subr.mxu0 0.0
    %1067 = vmatpush1.msra.mxu0 0.0
    %1068 = vmatprep.subr.mxu0 0.0
    %1069 = vmatpush1.msra.mxu0 0.0
    %1070 = vmatprep.subr.mxu0 0.0
    %1071 = vmatpush1.msra.mxu0 0.0
    %1072 = vmatprep.subr.mxu0 0.0
    %1073 = vmatpush1.msra.mxu0 0.0
    %1074 = vmatprep.subr.mxu0 0.0
    %1075 = vmatpush1.msra.mxu0 0.0
    %1076 = vmatprep.subr.mxu0 0.0
    %1077 = vmatpush1.msra.mxu0 0.0
    %1078 = vmatprep.subr.mxu0 0.0
    %1079 = vmatpush1.msra.mxu0 0.0
    %1080 = vmatprep.subr.mxu0 0.0
    %1081 = vmatpush1.msra.mxu0 0.0
    %1082 = vmatprep.subr.mxu0 0.0
    %1083 = vmatpush1.msra.mxu0 0.0
    %1084 = vmatprep.subr.mxu0 0.0
    %1085 = vmatpush1.msra.mxu0 0.0
    %1086 = vmatprep.subr.mxu0 0.0
    %1087 = vmatpush1.msra.mxu0 0.0
    %1088 = vmatprep.subr.mxu0 0.0
    %1089 = vmatpush1.msra.mxu0 0.0
    %1090 = vmatprep.subr.mxu0 0.0
    %1091 = vmatpush1.msra.mxu0 %v212
    %1092 = vmatprep.subr.mxu0 0.0
    %1093 = vmatpush1.msra.mxu0 %v211
    %1094 = vmatprep.subr.mxu0 0.0
    %1095 = vmatpush1.msra.mxu0 %v210
    %1096 = vmatprep.subr.mxu0 0.0
    %1097 = vmatpush1.msra.mxu0 %v209
    %1098 = vmatprep.subr.mxu0 0.0
    %1099 = vmatpush2.msra.mxu0 0.0
    %1100 = vmatprep.subr.mxu0 0.0
    %1101 = vmatpush2.msra.mxu0 0.0
    %1102 = vmatprep.subr.mxu0 0.0
    %1103 = vmatpush2.msra.mxu0 0.0
    %1104 = vmatprep.subr.mxu0 0.0
    %1105 = vmatpush2.msra.mxu0 0.0
    %1106 = vmatprep.subr.mxu0 0.0
    %1107 = vmatpush2.msra.mxu0 0.0
    %1108 = vmatprep.subr.mxu0 0.0
    %1109 = vmatpush2.msra.mxu0 0.0
    %1110 = vmatprep.subr.mxu0 0.0
    %1111 = vmatpush2.msra.mxu0 0.0
    %1112 = vmatprep.subr.mxu0 0.0
    %1113 = vmatpush2.msra.mxu0 0.0
    %1114 = vmatprep.subr.mxu0 0.0
    %1115 = vmatpush2.msra.mxu0 0.0
    %1116 = vmatprep.subr.mxu0 0.0
    %1117 = vmatpush2.msra.mxu0 0.0
    %1118 = vmatprep.subr.mxu0 0.0
    %1119 = vmatpush2.msra.mxu0 0.0
    %1120 = vmatprep.subr.mxu0 0.0
    %1121 = vmatpush2.msra.mxu0 0.0
    %1122 = vmatprep.subr.mxu0 0.0
    %1123 = vmatpush2.msra.mxu0 0.0
    %1124 = vmatprep.subr.mxu0 0.0
    %1125 = vmatpush2.msra.mxu0 0.0
    %1126 = vmatprep.subr.mxu0 0.0
    %1127 = vmatpush2.msra.mxu0 0.0
    %1128 = vmatprep.subr.mxu0 0.0
    %1129 = vmatpush2.msra.mxu0 0.0
    %1130 = vmatprep.mubr.f32.mxu0 0.0
    %1131 = vmatmul.mubr.f32.gmra.mxu0 %v1064
    %v1132 = vpop.f32.mrf.mxu0
    %v1133 = vadd.f32 0.0, %v1132
    %v1134 = vpop.f32.mrf.mxu0
    %1135 = vdwg.mxu0
    %v1136 = vadd.f32 %v1058, %v1133
    %v1137 = vxor.u32 %v1136, 2147483648
    %v1138 = vmul.f32 %v1137, 1.442695
    %v1139 = vpow.pop %v1138
    %v1140 = vadd.f32 %v1139, 1.0
    %v1141 = vrcp.pop %v1140
    %v1142 = vmul.f32 1.0, %v1141
    %v1143 = vmul.f32 %v1142, 2.0
    %v1144 = vsub.f32 %v1143, 1.0
    %v1145 = vmul.f32 %v1142, %v883
    %1147 = vrot.lane.b32.xlu0 %v1144, 64
    %v1148 = vpop.permute.xlu0 %1147
    %v1150 = vmul.f32 %v1142, %v1148
    %1152 = vrot.lane.b32.xlu0 %v1150, 32
    %v1153 = vpop.permute.xlu0 %1152
    %v1155 = vadd.f32 %v1145, %v1153
    %v1156 = vtanh.pop %v1155
    %1158 = vrot.lane.b32.xlu0 %v1156, 64
    %v1159 = vpop.permute.xlu0 %1158
    %v1161 = vmul.f32 %v1142, %v1159
    %1162 = vmatprep.subr.mxu0 0.0
    %1163 = vmatpush1.msra.mxu0 0.0
    %1164 = vmatprep.subr.mxu0 0.0
    %1165 = vmatpush1.msra.mxu0 0.0
    %1166 = vmatprep.subr.mxu0 0.0
    %1167 = vmatpush1.msra.mxu0 0.0
    %1168 = vmatprep.subr.mxu0 0.0
    %1169 = vmatpush1.msra.mxu0 0.0
    %1170 = vmatprep.subr.mxu0 0.0
    %1171 = vmatpush1.msra.mxu0 0.0
    %1172 = vmatprep.subr.mxu0 0.0
    %1173 = vmatpush1.msra.mxu0 0.0
    %1174 = vmatprep.subr.mxu0 0.0
    %1175 = vmatpush1.msra.mxu0 0.0
    %1176 = vmatprep.subr.mxu0 0.0
    %1177 = vmatpush1.msra.mxu0 0.0
    %1178 = vmatprep.subr.mxu0 0.0
    %1179 = vmatpush1.msra.mxu0 0.0
    %1180 = vmatprep.subr.mxu0 0.0
    %1181 = vmatpush1.msra.mxu0 0.0
    %1182 = vmatprep.subr.mxu0 0.0
    %1183 = vmatpush1.msra.mxu0 0.0
    %1184 = vmatprep.subr.mxu0 0.0
    %1185 = vmatpush1.msra.mxu0 0.0
    %1186 = vmatprep.subr.mxu0 0.0
    %1187 = vmatpush1.msra.mxu0 %v208
    %1188 = vmatprep.subr.mxu0 0.0
    %1189 = vmatpush1.msra.mxu0 %v207
    %1190 = vmatprep.subr.mxu0 0.0
    %1191 = vmatpush1.msra.mxu0 %v206
    %1192 = vmatprep.subr.mxu0 0.0
    %1193 = vmatpush1.msra.mxu0 %v205
    %1194 = vmatprep.subr.mxu0 0.0
    %1195 = vmatpush2.msra.mxu0 0.0
    %1196 = vmatprep.subr.mxu0 0.0
    %1197 = vmatpush2.msra.mxu0 0.0
    %1198 = vmatprep.subr.mxu0 0.0
    %1199 = vmatpush2.msra.mxu0 0.0
    %1200 = vmatprep.subr.mxu0 0.0
    %1201 = vmatpush2.msra.mxu0 0.0
    %1202 = vmatprep.subr.mxu0 0.0
    %1203 = vmatpush2.msra.mxu0 0.0
    %1204 = vmatprep.subr.mxu0 0.0
    %1205 = vmatpush2.msra.mxu0 0.0
    %1206 = vmatprep.subr.mxu0 0.0
    %1207 = vmatpush2.msra.mxu0 0.0
    %1208 = vmatprep.subr.mxu0 0.0
    %1209 = vmatpush2.msra.mxu0 0.0
    %1210 = vmatprep.subr.mxu0 0.0
    %1211 = vmatpush2.msra.mxu0 0.0
    %1212 = vmatprep.subr.mxu0 0.0
    %1213 = vmatpush2.msra.mxu0 0.0
    %1214 = vmatprep.subr.mxu0 0.0
    %1215 = vmatpush2.msra.mxu0 0.0
    %1216 = vmatprep.subr.mxu0 0.0
    %1217 = vmatpush2.msra.mxu0 0.0
    %1218 = vmatprep.subr.mxu0 0.0
    %1219 = vmatpush2.msra.mxu0 0.0
    %1220 = vmatprep.subr.mxu0 0.0
    %1221 = vmatpush2.msra.mxu0 0.0
    %1222 = vmatprep.subr.mxu0 0.0
    %1223 = vmatpush2.msra.mxu0 0.0
    %1224 = vmatprep.subr.mxu0 0.0
    %1225 = vmatpush2.msra.mxu0 0.0
    %1226 = vmatprep.mubr.f32.mxu0 0.0
    %1227 = vmatmul.mubr.f32.gmra.mxu0 %v989
    %v1228 = vpop.f32.mrf.mxu0
    %v1229 = vadd.f32 0.0, %v1228
    %v1230 = vpop.f32.mrf.mxu0
    %1231 = vdwg.mxu0
    %v1232 = vadd.f32 %v187, %v1229
    %v1233 = vxor.u32 %v1232, 2147483648
    %v1234 = vmul.f32 %v1233, 1.442695
    %v1235 = vpow.pop %v1234
    %v1236 = vadd.f32 %v1235, 1.0
    %v1237 = vrcp.pop %v1236
    %v1238 = vmul.f32 1.0, %v1237
    %v1239 = vmul.f32 %v1238, 2.0
    %v1240 = vsub.f32 %v1239, 1.0
    %v1241 = vmul.f32 %v1238, %v979
    %1243 = vrot.lane.b32.xlu0 %v1240, 64
    %v1244 = vpop.permute.xlu0 %1243
    %v1246 = vmul.f32 %v1238, %v1244
    %1248 = vrot.lane.b32.xlu0 %v1246, 32
    %v1249 = vpop.permute.xlu0 %1248
    %v1251 = vadd.f32 %v1241, %v1249
    %v1252 = vtanh.pop %v1251
    %1254 = vrot.lane.b32.xlu0 %v1252, 64
    %v1255 = vpop.permute.xlu0 %1254
    %v1257 = vmul.f32 %v1238, %v1255
    %1259 = vrot.lane.b32.xlu0 %v1257, 32
    %v1260 = vpop.permute.xlu0 %1259
    %v1261 = vsel %vm246, %v1260, 0
    %1263 = vmatprep.subr.mxu0 0.0
    %1264 = vmatpush1.msra.mxu0 0.0
    %1265 = vmatprep.subr.mxu0 0.0
    %1266 = vmatpush1.msra.mxu0 0.0
    %1267 = vmatprep.subr.mxu0 0.0
    %1268 = vmatpush1.msra.mxu0 0.0
    %1269 = vmatprep.subr.mxu0 0.0
    %1270 = vmatpush1.msra.mxu0 0.0
    %1271 = vmatprep.subr.mxu0 0.0
    %1272 = vmatpush1.msra.mxu0 0.0
    %1273 = vmatprep.subr.mxu0 0.0
    %1274 = vmatpush1.msra.mxu0 0.0
    %1275 = vmatprep.subr.mxu0 0.0
    %1276 = vmatpush1.msra.mxu0 0.0
    %1277 = vmatprep.subr.mxu0 0.0
    %1278 = vmatpush1.msra.mxu0 0.0
    %1279 = vmatprep.subr.mxu0 0.0
    %1280 = vmatpush1.msra.mxu0 0.0
    %1281 = vmatprep.subr.mxu0 0.0
    %1282 = vmatpush1.msra.mxu0 0.0
    %1283 = vmatprep.subr.mxu0 0.0
    %1284 = vmatpush1.msra.mxu0 0.0
    %1285 = vmatprep.subr.mxu0 0.0
    %1286 = vmatpush1.msra.mxu0 0.0
    %1287 = vmatprep.subr.mxu0 0.0
    %1288 = vmatpush1.msra.mxu0 %v216
    %1289 = vmatprep.subr.mxu0 0.0
    %1290 = vmatpush1.msra.mxu0 %v215
    %1291 = vmatprep.subr.mxu0 0.0
    %1292 = vmatpush1.msra.mxu0 %v214
    %1293 = vmatprep.subr.mxu0 0.0
    %1294 = vmatpush1.msra.mxu0 %v213
    %1295 = vmatprep.subr.mxu0 0.0
    %1296 = vmatpush2.msra.mxu0 0.0
    %1297 = vmatprep.subr.mxu0 0.0
    %1298 = vmatpush2.msra.mxu0 0.0
    %1299 = vmatprep.subr.mxu0 0.0
    %1300 = vmatpush2.msra.mxu0 0.0
    %1301 = vmatprep.subr.mxu0 0.0
    %1302 = vmatpush2.msra.mxu0 0.0
    %1303 = vmatprep.subr.mxu0 0.0
    %1304 = vmatpush2.msra.mxu0 0.0
    %1305 = vmatprep.subr.mxu0 0.0
    %1306 = vmatpush2.msra.mxu0 0.0
    %1307 = vmatprep.subr.mxu0 0.0
    %1308 = vmatpush2.msra.mxu0 0.0
    %1309 = vmatprep.subr.mxu0 0.0
    %1310 = vmatpush2.msra.mxu0 0.0
    %1311 = vmatprep.subr.mxu0 0.0
    %1312 = vmatpush2.msra.mxu0 0.0
    %1313 = vmatprep.subr.mxu0 0.0
    %1314 = vmatpush2.msra.mxu0 0.0
    %1315 = vmatprep.subr.mxu0 0.0
    %1316 = vmatpush2.msra.mxu0 0.0
    %1317 = vmatprep.subr.mxu0 0.0
    %1318 = vmatpush2.msra.mxu0 0.0
    %1319 = vmatprep.subr.mxu0 0.0
    %1320 = vmatpush2.msra.mxu0 0.0
    %1321 = vmatprep.subr.mxu0 0.0
    %1322 = vmatpush2.msra.mxu0 0.0
    %1323 = vmatprep.subr.mxu0 0.0
    %1324 = vmatpush2.msra.mxu0 0.0
    %1325 = vmatprep.subr.mxu0 0.0
    %1326 = vmatpush2.msra.mxu0 0.0
    %1327 = vmatprep.mubr.f32.mxu0 0.0
    %1328 = vmatmul.mubr.f32.gmra.mxu0 %v1261
    %v1329 = vpop.f32.mrf.mxu0
    %v1330 = vadd.f32 %v241, %v1329
    %v1331 = vpop.f32.mrf.mxu0
    %1332 = vdwg.mxu0
    %1334 = vrot.lane.b32.xlu0 %v1161, 32
    %v1335 = vpop.permute.xlu0 %1334
    %v1336 = vsel %vm246, %v1335, 0
    %1338 = vmatprep.subr.mxu0 0.0
    %1339 = vmatpush1.msra.mxu0 0.0
    %1340 = vmatprep.subr.mxu0 0.0
    %1341 = vmatpush1.msra.mxu0 0.0
    %1342 = vmatprep.subr.mxu0 0.0
    %1343 = vmatpush1.msra.mxu0 0.0
    %1344 = vmatprep.subr.mxu0 0.0
    %1345 = vmatpush1.msra.mxu0 0.0
    %1346 = vmatprep.subr.mxu0 0.0
    %1347 = vmatpush1.msra.mxu0 0.0
    %1348 = vmatprep.subr.mxu0 0.0
    %1349 = vmatpush1.msra.mxu0 0.0
    %1350 = vmatprep.subr.mxu0 0.0
    %1351 = vmatpush1.msra.mxu0 0.0
    %1352 = vmatprep.subr.mxu0 0.0
    %1353 = vmatpush1.msra.mxu0 0.0
    %1354 = vmatprep.subr.mxu0 0.0
    %1355 = vmatpush1.msra.mxu0 0.0
    %1356 = vmatprep.subr.mxu0 0.0
    %1357 = vmatpush1.msra.mxu0 0.0
    %1358 = vmatprep.subr.mxu0 0.0
    %1359 = vmatpush1.msra.mxu0 0.0
    %1360 = vmatprep.subr.mxu0 0.0
    %1361 = vmatpush1.msra.mxu0 0.0
    %1362 = vmatprep.subr.mxu0 0.0
    %1363 = vmatpush1.msra.mxu0 %v212
    %1364 = vmatprep.subr.mxu0 0.0
    %1365 = vmatpush1.msra.mxu0 %v211
    %1366 = vmatprep.subr.mxu0 0.0
    %1367 = vmatpush1.msra.mxu0 %v210
    %1368 = vmatprep.subr.mxu0 0.0
    %1369 = vmatpush1.msra.mxu0 %v209
    %1370 = vmatprep.subr.mxu0 0.0
    %1371 = vmatpush2.msra.mxu0 0.0
    %1372 = vmatprep.subr.mxu0 0.0
    %1373 = vmatpush2.msra.mxu0 0.0
    %1374 = vmatprep.subr.mxu0 0.0
    %1375 = vmatpush2.msra.mxu0 0.0
    %1376 = vmatprep.subr.mxu0 0.0
    %1377 = vmatpush2.msra.mxu0 0.0
    %1378 = vmatprep.subr.mxu0 0.0
    %1379 = vmatpush2.msra.mxu0 0.0
    %1380 = vmatprep.subr.mxu0 0.0
    %1381 = vmatpush2.msra.mxu0 0.0
    %1382 = vmatprep.subr.mxu0 0.0
    %1383 = vmatpush2.msra.mxu0 0.0
    %1384 = vmatprep.subr.mxu0 0.0
    %1385 = vmatpush2.msra.mxu0 0.0
    %1386 = vmatprep.subr.mxu0 0.0
    %1387 = vmatpush2.msra.mxu0 0.0
    %1388 = vmatprep.subr.mxu0 0.0
    %1389 = vmatpush2.msra.mxu0 0.0
    %1390 = vmatprep.subr.mxu0 0.0
    %1391 = vmatpush2.msra.mxu0 0.0
    %1392 = vmatprep.subr.mxu0 0.0
    %1393 = vmatpush2.msra.mxu0 0.0
    %1394 = vmatprep.subr.mxu0 0.0
    %1395 = vmatpush2.msra.mxu0 0.0
    %1396 = vmatprep.subr.mxu0 0.0
    %1397 = vmatpush2.msra.mxu0 0.0
    %1398 = vmatprep.subr.mxu0 0.0
    %1399 = vmatpush2.msra.mxu0 0.0
    %1400 = vmatprep.subr.mxu0 0.0
    %1401 = vmatpush2.msra.mxu0 0.0
    %1402 = vmatprep.mubr.f32.mxu0 0.0
    %1403 = vmatmul.mubr.f32.gmra.mxu0 %v1336
    %v1404 = vpop.f32.mrf.mxu0
    %v1405 = vadd.f32 0.0, %v1404
    %v1406 = vpop.f32.mrf.mxu0
    %1407 = vdwg.mxu0
    %v1408 = vadd.f32 %v1330, %v1405
    %v1409 = vxor.u32 %v1408, 2147483648
    %v1410 = vmul.f32 %v1409, 1.442695
    %v1411 = vpow.pop %v1410
    %v1412 = vadd.f32 %v1411, 1.0
    %v1413 = vrcp.pop %v1412
    %v1414 = vmul.f32 1.0, %v1413
    %v1415 = vmul.f32 %v1414, 2.0
    %v1416 = vsub.f32 %v1415, 1.0
    %v1417 = vmul.f32 %v1414, %v1155
    %1419 = vrot.lane.b32.xlu0 %v1416, 64
    %v1420 = vpop.permute.xlu0 %1419
    %v1422 = vmul.f32 %v1414, %v1420
    %1424 = vrot.lane.b32.xlu0 %v1422, 32
    %v1425 = vpop.permute.xlu0 %1424
    %v1427 = vadd.f32 %v1417, %v1425
    %v1428 = vtanh.pop %v1427
    %1430 = vrot.lane.b32.xlu0 %v1428, 64
    %v1431 = vpop.permute.xlu0 %1430
    %v1433 = vmul.f32 %v1414, %v1431
    %1434 = vmatprep.subr.mxu0 0.0
    %1435 = vmatpush1.msra.mxu0 0.0
    %1436 = vmatprep.subr.mxu0 0.0
    %1437 = vmatpush1.msra.mxu0 0.0
    %1438 = vmatprep.subr.mxu0 0.0
    %1439 = vmatpush1.msra.mxu0 0.0
    %1440 = vmatprep.subr.mxu0 0.0
    %1441 = vmatpush1.msra.mxu0 0.0
    %1442 = vmatprep.subr.mxu0 0.0
    %1443 = vmatpush1.msra.mxu0 0.0
    %1444 = vmatprep.subr.mxu0 0.0
    %1445 = vmatpush1.msra.mxu0 0.0
    %1446 = vmatprep.subr.mxu0 0.0
    %1447 = vmatpush1.msra.mxu0 0.0
    %1448 = vmatprep.subr.mxu0 0.0
    %1449 = vmatpush1.msra.mxu0 0.0
    %1450 = vmatprep.subr.mxu0 0.0
    %1451 = vmatpush1.msra.mxu0 0.0
    %1452 = vmatprep.subr.mxu0 0.0
    %1453 = vmatpush1.msra.mxu0 0.0
    %1454 = vmatprep.subr.mxu0 0.0
    %1455 = vmatpush1.msra.mxu0 0.0
    %1456 = vmatprep.subr.mxu0 0.0
    %1457 = vmatpush1.msra.mxu0 0.0
    %1458 = vmatprep.subr.mxu0 0.0
    %1459 = vmatpush1.msra.mxu0 %v208
    %1460 = vmatprep.subr.mxu0 0.0
    %1461 = vmatpush1.msra.mxu0 %v207
    %1462 = vmatprep.subr.mxu0 0.0
    %1463 = vmatpush1.msra.mxu0 %v206
    %1464 = vmatprep.subr.mxu0 0.0
    %1465 = vmatpush1.msra.mxu0 %v205
    %1466 = vmatprep.subr.mxu0 0.0
    %1467 = vmatpush2.msra.mxu0 0.0
    %1468 = vmatprep.subr.mxu0 0.0
    %1469 = vmatpush2.msra.mxu0 0.0
    %1470 = vmatprep.subr.mxu0 0.0
    %1471 = vmatpush2.msra.mxu0 0.0
    %1472 = vmatprep.subr.mxu0 0.0
    %1473 = vmatpush2.msra.mxu0 0.0
    %1474 = vmatprep.subr.mxu0 0.0
    %1475 = vmatpush2.msra.mxu0 0.0
    %1476 = vmatprep.subr.mxu0 0.0
    %1477 = vmatpush2.msra.mxu0 0.0
    %1478 = vmatprep.subr.mxu0 0.0
    %1479 = vmatpush2.msra.mxu0 0.0
    %1480 = vmatprep.subr.mxu0 0.0
    %1481 = vmatpush2.msra.mxu0 0.0
    %1482 = vmatprep.subr.mxu0 0.0
    %1483 = vmatpush2.msra.mxu0 0.0
    %1484 = vmatprep.subr.mxu0 0.0
    %1485 = vmatpush2.msra.mxu0 0.0
    %1486 = vmatprep.subr.mxu0 0.0
    %1487 = vmatpush2.msra.mxu0 0.0
    %1488 = vmatprep.subr.mxu0 0.0
    %1489 = vmatpush2.msra.mxu0 0.0
    %1490 = vmatprep.subr.mxu0 0.0
    %1491 = vmatpush2.msra.mxu0 0.0
    %1492 = vmatprep.subr.mxu0 0.0
    %1493 = vmatpush2.msra.mxu0 0.0
    %1494 = vmatprep.subr.mxu0 0.0
    %1495 = vmatpush2.msra.mxu0 0.0
    %1496 = vmatprep.subr.mxu0 0.0
    %1497 = vmatpush2.msra.mxu0 0.0
    %1498 = vmatprep.mubr.f32.mxu0 0.0
    %1499 = vmatmul.mubr.f32.gmra.mxu0 %v1261
    %v1500 = vpop.f32.mrf.mxu0
    %v1501 = vadd.f32 0.0, %v1500
    %v1502 = vpop.f32.mrf.mxu0
    %1503 = vdwg.mxu0
    %v1504 = vadd.f32 %v192, %v1501
    %v1505 = vxor.u32 %v1504, 2147483648
    %v1506 = vmul.f32 %v1505, 1.442695
    %v1507 = vpow.pop %v1506
    %v1508 = vadd.f32 %v1507, 1.0
    %v1509 = vrcp.pop %v1508
    %v1510 = vmul.f32 1.0, %v1509
    %v1511 = vmul.f32 %v1510, 2.0
    %v1512 = vsub.f32 %v1511, 1.0
    %v1513 = vmul.f32 %v1510, %v1251
    %1515 = vrot.lane.b32.xlu0 %v1512, 64
    %v1516 = vpop.permute.xlu0 %1515
    %v1518 = vmul.f32 %v1510, %v1516
    %1520 = vrot.lane.b32.xlu0 %v1518, 32
    %v1521 = vpop.permute.xlu0 %1520
    %v1523 = vadd.f32 %v1513, %v1521
    %v1524 = vtanh.pop %v1523
    %1526 = vrot.lane.b32.xlu0 %v1524, 64
    %v1527 = vpop.permute.xlu0 %1526
    %v1529 = vmul.f32 %v1510, %v1527
    %1531 = vrot.lane.b32.xlu0 %v1529, 32
    %v1532 = vpop.permute.xlu0 %1531
    %v1533 = vsel %vm246, %v1532, 0
    %1535 = vmatprep.subr.mxu0 0.0
    %1536 = vmatpush1.msra.mxu0 0.0
    %1537 = vmatprep.subr.mxu0 0.0
    %1538 = vmatpush1.msra.mxu0 0.0
    %1539 = vmatprep.subr.mxu0 0.0
    %1540 = vmatpush1.msra.mxu0 0.0
    %1541 = vmatprep.subr.mxu0 0.0
    %1542 = vmatpush1.msra.mxu0 0.0
    %1543 = vmatprep.subr.mxu0 0.0
    %1544 = vmatpush1.msra.mxu0 0.0
    %1545 = vmatprep.subr.mxu0 0.0
    %1546 = vmatpush1.msra.mxu0 0.0
    %1547 = vmatprep.subr.mxu0 0.0
    %1548 = vmatpush1.msra.mxu0 0.0
    %1549 = vmatprep.subr.mxu0 0.0
    %1550 = vmatpush1.msra.mxu0 0.0
    %1551 = vmatprep.subr.mxu0 0.0
    %1552 = vmatpush1.msra.mxu0 0.0
    %1553 = vmatprep.subr.mxu0 0.0
    %1554 = vmatpush1.msra.mxu0 0.0
    %1555 = vmatprep.subr.mxu0 0.0
    %1556 = vmatpush1.msra.mxu0 0.0
    %1557 = vmatprep.subr.mxu0 0.0
    %1558 = vmatpush1.msra.mxu0 0.0
    %1559 = vmatprep.subr.mxu0 0.0
    %1560 = vmatpush1.msra.mxu0 %v216
    %1561 = vmatprep.subr.mxu0 0.0
    %1562 = vmatpush1.msra.mxu0 %v215
    %1563 = vmatprep.subr.mxu0 0.0
    %1564 = vmatpush1.msra.mxu0 %v214
    %1565 = vmatprep.subr.mxu0 0.0
    %1566 = vmatpush1.msra.mxu0 %v213
    %1567 = vmatprep.subr.mxu0 0.0
    %1568 = vmatpush2.msra.mxu0 0.0
    %1569 = vmatprep.subr.mxu0 0.0
    %1570 = vmatpush2.msra.mxu0 0.0
    %1571 = vmatprep.subr.mxu0 0.0
    %1572 = vmatpush2.msra.mxu0 0.0
    %1573 = vmatprep.subr.mxu0 0.0
    %1574 = vmatpush2.msra.mxu0 0.0
    %1575 = vmatprep.subr.mxu0 0.0
    %1576 = vmatpush2.msra.mxu0 0.0
    %1577 = vmatprep.subr.mxu0 0.0
    %1578 = vmatpush2.msra.mxu0 0.0
    %1579 = vmatprep.subr.mxu0 0.0
    %1580 = vmatpush2.msra.mxu0 0.0
    %1581 = vmatprep.subr.mxu0 0.0
    %1582 = vmatpush2.msra.mxu0 0.0
    %1583 = vmatprep.subr.mxu0 0.0
    %1584 = vmatpush2.msra.mxu0 0.0
    %1585 = vmatprep.subr.mxu0 0.0
    %1586 = vmatpush2.msra.mxu0 0.0
    %1587 = vmatprep.subr.mxu0 0.0
    %1588 = vmatpush2.msra.mxu0 0.0
    %1589 = vmatprep.subr.mxu0 0.0
    %1590 = vmatpush2.msra.mxu0 0.0
    %1591 = vmatprep.subr.mxu0 0.0
    %1592 = vmatpush2.msra.mxu0 0.0
    %1593 = vmatprep.subr.mxu0 0.0
    %1594 = vmatpush2.msra.mxu0 0.0
    %1595 = vmatprep.subr.mxu0 0.0
    %1596 = vmatpush2.msra.mxu0 0.0
    %1597 = vmatprep.subr.mxu0 0.0
    %1598 = vmatpush2.msra.mxu0 0.0
    %1599 = vmatprep.mubr.f32.mxu0 0.0
    %1600 = vmatmul.mubr.f32.gmra.mxu0 %v1533
    %v1601 = vpop.f32.mrf.mxu0
    %v1602 = vadd.f32 %v241, %v1601
    %v1603 = vpop.f32.mrf.mxu0
    %1604 = vdwg.mxu0
    %1606 = vrot.lane.b32.xlu0 %v1433, 32
    %v1607 = vpop.permute.xlu0 %1606
    %v1608 = vsel %vm246, %v1607, 0
    %1610 = vmatprep.subr.mxu0 0.0
    %1611 = vmatpush1.msra.mxu0 0.0
    %1612 = vmatprep.subr.mxu0 0.0
    %1613 = vmatpush1.msra.mxu0 0.0
    %1614 = vmatprep.subr.mxu0 0.0
    %1615 = vmatpush1.msra.mxu0 0.0
    %1616 = vmatprep.subr.mxu0 0.0
    %1617 = vmatpush1.msra.mxu0 0.0
    %1618 = vmatprep.subr.mxu0 0.0
    %1619 = vmatpush1.msra.mxu0 0.0
    %1620 = vmatprep.subr.mxu0 0.0
    %1621 = vmatpush1.msra.mxu0 0.0
    %1622 = vmatprep.subr.mxu0 0.0
    %1623 = vmatpush1.msra.mxu0 0.0
    %1624 = vmatprep.subr.mxu0 0.0
    %1625 = vmatpush1.msra.mxu0 0.0
    %1626 = vmatprep.subr.mxu0 0.0
    %1627 = vmatpush1.msra.mxu0 0.0
    %1628 = vmatprep.subr.mxu0 0.0
    %1629 = vmatpush1.msra.mxu0 0.0
    %1630 = vmatprep.subr.mxu0 0.0
    %1631 = vmatpush1.msra.mxu0 0.0
    %1632 = vmatprep.subr.mxu0 0.0
    %1633 = vmatpush1.msra.mxu0 0.0
    %1634 = vmatprep.subr.mxu0 0.0
    %1635 = vmatpush1.msra.mxu0 %v212
    %1636 = vmatprep.subr.mxu0 0.0
    %1637 = vmatpush1.msra.mxu0 %v211
    %1638 = vmatprep.subr.mxu0 0.0
    %1639 = vmatpush1.msra.mxu0 %v210
    %1640 = vmatprep.subr.mxu0 0.0
    %1641 = vmatpush1.msra.mxu0 %v209
    %1642 = vmatprep.subr.mxu0 0.0
    %1643 = vmatpush2.msra.mxu0 0.0
    %1644 = vmatprep.subr.mxu0 0.0
    %1645 = vmatpush2.msra.mxu0 0.0
    %1646 = vmatprep.subr.mxu0 0.0
    %1647 = vmatpush2.msra.mxu0 0.0
    %1648 = vmatprep.subr.mxu0 0.0
    %1649 = vmatpush2.msra.mxu0 0.0
    %1650 = vmatprep.subr.mxu0 0.0
    %1651 = vmatpush2.msra.mxu0 0.0
    %1652 = vmatprep.subr.mxu0 0.0
    %1653 = vmatpush2.msra.mxu0 0.0
    %1654 = vmatprep.subr.mxu0 0.0
    %1655 = vmatpush2.msra.mxu0 0.0
    %1656 = vmatprep.subr.mxu0 0.0
    %1657 = vmatpush2.msra.mxu0 0.0
    %1658 = vmatprep.subr.mxu0 0.0
    %1659 = vmatpush2.msra.mxu0 0.0
    %1660 = vmatprep.subr.mxu0 0.0
    %1661 = vmatpush2.msra.mxu0 0.0
    %1662 = vmatprep.subr.mxu0 0.0
    %1663 = vmatpush2.msra.mxu0 0.0
    %1664 = vmatprep.subr.mxu0 0.0
    %1665 = vmatpush2.msra.mxu0 0.0
    %1666 = vmatprep.subr.mxu0 0.0
    %1667 = vmatpush2.msra.mxu0 0.0
    %1668 = vmatprep.subr.mxu0 0.0
    %1669 = vmatpush2.msra.mxu0 0.0
    %1670 = vmatprep.subr.mxu0 0.0
    %1671 = vmatpush2.msra.mxu0 0.0
    %1672 = vmatprep.subr.mxu0 0.0
    %1673 = vmatpush2.msra.mxu0 0.0
    %1674 = vmatprep.mubr.f32.mxu0 0.0
    %1675 = vmatmul.mubr.f32.gmra.mxu0 %v1608
    %v1676 = vpop.f32.mrf.mxu0
    %v1677 = vadd.f32 0.0, %v1676
    %v1678 = vpop.f32.mrf.mxu0
    %1679 = vdwg.mxu0
    %v1680 = vadd.f32 %v1602, %v1677
    %v1681 = vxor.u32 %v1680, 2147483648
    %v1682 = vmul.f32 %v1681, 1.442695
    %v1683 = vpow.pop %v1682
    %v1684 = vadd.f32 %v1683, 1.0
    %v1685 = vrcp.pop %v1684
    %v1686 = vmul.f32 1.0, %v1685
    %v1687 = vmul.f32 %v1686, 2.0
    %v1688 = vsub.f32 %v1687, 1.0
    %v1689 = vmul.f32 %v1686, %v1427
    %1691 = vrot.lane.b32.xlu0 %v1688, 64
    %v1692 = vpop.permute.xlu0 %1691
    %v1694 = vmul.f32 %v1686, %v1692
    %1696 = vrot.lane.b32.xlu0 %v1694, 32
    %v1697 = vpop.permute.xlu0 %1696
    %v1699 = vadd.f32 %v1689, %v1697
    %v1700 = vtanh.pop %v1699
    %1702 = vrot.lane.b32.xlu0 %v1700, 64
    %v1703 = vpop.permute.xlu0 %1702
    %v1705 = vmul.f32 %v1686, %v1703
    %1706 = vmatprep.subr.mxu0 0.0
    %1707 = vmatpush1.msra.mxu0 0.0
    %1708 = vmatprep.subr.mxu0 0.0
    %1709 = vmatpush1.msra.mxu0 0.0
    %1710 = vmatprep.subr.mxu0 0.0
    %1711 = vmatpush1.msra.mxu0 0.0
    %1712 = vmatprep.subr.mxu0 0.0
    %1713 = vmatpush1.msra.mxu0 0.0
    %1714 = vmatprep.subr.mxu0 0.0
    %1715 = vmatpush1.msra.mxu0 0.0
    %1716 = vmatprep.subr.mxu0 0.0
    %1717 = vmatpush1.msra.mxu0 0.0
    %1718 = vmatprep.subr.mxu0 0.0
    %1719 = vmatpush1.msra.mxu0 0.0
    %1720 = vmatprep.subr.mxu0 0.0
    %1721 = vmatpush1.msra.mxu0 0.0
    %1722 = vmatprep.subr.mxu0 0.0
    %1723 = vmatpush1.msra.mxu0 0.0
    %1724 = vmatprep.subr.mxu0 0.0
    %1725 = vmatpush1.msra.mxu0 0.0
    %1726 = vmatprep.subr.mxu0 0.0
    %1727 = vmatpush1.msra.mxu0 0.0
    %1728 = vmatprep.subr.mxu0 0.0
    %1729 = vmatpush1.msra.mxu0 0.0
    %1730 = vmatprep.subr.mxu0 0.0
    %1731 = vmatpush1.msra.mxu0 %v208
    %1732 = vmatprep.subr.mxu0 0.0
    %1733 = vmatpush1.msra.mxu0 %v207
    %1734 = vmatprep.subr.mxu0 0.0
    %1735 = vmatpush1.msra.mxu0 %v206
    %1736 = vmatprep.subr.mxu0 0.0
    %1737 = vmatpush1.msra.mxu0 %v205
    %1738 = vmatprep.subr.mxu0 0.0
    %1739 = vmatpush2.msra.mxu0 0.0
    %1740 = vmatprep.subr.mxu0 0.0
    %1741 = vmatpush2.msra.mxu0 0.0
    %1742 = vmatprep.subr.mxu0 0.0
    %1743 = vmatpush2.msra.mxu0 0.0
    %1744 = vmatprep.subr.mxu0 0.0
    %1745 = vmatpush2.msra.mxu0 0.0
    %1746 = vmatprep.subr.mxu0 0.0
    %1747 = vmatpush2.msra.mxu0 0.0
    %1748 = vmatprep.subr.mxu0 0.0
    %1749 = vmatpush2.msra.mxu0 0.0
    %1750 = vmatprep.subr.mxu0 0.0
    %1751 = vmatpush2.msra.mxu0 0.0
    %1752 = vmatprep.subr.mxu0 0.0
    %1753 = vmatpush2.msra.mxu0 0.0
    %1754 = vmatprep.subr.mxu0 0.0
    %1755 = vmatpush2.msra.mxu0 0.0
    %1756 = vmatprep.subr.mxu0 0.0
    %1757 = vmatpush2.msra.mxu0 0.0
    %1758 = vmatprep.subr.mxu0 0.0
    %1759 = vmatpush2.msra.mxu0 0.0
    %1760 = vmatprep.subr.mxu0 0.0
    %1761 = vmatpush2.msra.mxu0 0.0
    %1762 = vmatprep.subr.mxu0 0.0
    %1763 = vmatpush2.msra.mxu0 0.0
    %1764 = vmatprep.subr.mxu0 0.0
    %1765 = vmatpush2.msra.mxu0 0.0
    %1766 = vmatprep.subr.mxu0 0.0
    %1767 = vmatpush2.msra.mxu0 0.0
    %1768 = vmatprep.subr.mxu0 0.0
    %1769 = vmatpush2.msra.mxu0 0.0
    %1770 = vmatprep.mubr.f32.mxu0 0.0
    %1771 = vmatmul.mubr.f32.gmra.mxu0 %v1533
    %v1772 = vpop.f32.mrf.mxu0
    %v1773 = vadd.f32 0.0, %v1772
    %v1774 = vpop.f32.mrf.mxu0
    %1775 = vdwg.mxu0
    %v1776 = vadd.f32 %v197, %v1773
    %v1777 = vxor.u32 %v1776, 2147483648
    %v1778 = vmul.f32 %v1777, 1.442695
    %v1779 = vpow.pop %v1778
    %v1780 = vadd.f32 %v1779, 1.0
    %v1781 = vrcp.pop %v1780
    %v1782 = vmul.f32 1.0, %v1781
    %v1783 = vmul.f32 %v1782, 2.0
    %v1784 = vsub.f32 %v1783, 1.0
    %v1785 = vmul.f32 %v1782, %v1523
    %1787 = vrot.lane.b32.xlu0 %v1784, 64
    %v1788 = vpop.permute.xlu0 %1787
    %v1790 = vmul.f32 %v1782, %v1788
    %1792 = vrot.lane.b32.xlu0 %v1790, 32
    %v1793 = vpop.permute.xlu0 %1792
    %v1795 = vadd.f32 %v1785, %v1793
    %v1796 = vtanh.pop %v1795
    %1798 = vrot.lane.b32.xlu0 %v1796, 64
    %v1799 = vpop.permute.xlu0 %1798
    %v1801 = vmul.f32 %v1782, %v1799
    %1803 = vrot.lane.b32.xlu0 %v1801, 32
    %v1804 = vpop.permute.xlu0 %1803
    %v1805 = vsel %vm246, %v1804, 0
    %1807 = vmatprep.subr.mxu0 0.0
    %1808 = vmatpush1.msra.mxu0 0.0
    %1809 = vmatprep.subr.mxu0 0.0
    %1810 = vmatpush1.msra.mxu0 0.0
    %1811 = vmatprep.subr.mxu0 0.0
    %1812 = vmatpush1.msra.mxu0 0.0
    %1813 = vmatprep.subr.mxu0 0.0
    %1814 = vmatpush1.msra.mxu0 0.0
    %1815 = vmatprep.subr.mxu0 0.0
    %1816 = vmatpush1.msra.mxu0 0.0
    %1817 = vmatprep.subr.mxu0 0.0
    %1818 = vmatpush1.msra.mxu0 0.0
    %1819 = vmatprep.subr.mxu0 0.0
    %1820 = vmatpush1.msra.mxu0 0.0
    %1821 = vmatprep.subr.mxu0 0.0
    %1822 = vmatpush1.msra.mxu0 0.0
    %1823 = vmatprep.subr.mxu0 0.0
    %1824 = vmatpush1.msra.mxu0 0.0
    %1825 = vmatprep.subr.mxu0 0.0
    %1826 = vmatpush1.msra.mxu0 0.0
    %1827 = vmatprep.subr.mxu0 0.0
    %1828 = vmatpush1.msra.mxu0 0.0
    %1829 = vmatprep.subr.mxu0 0.0
    %1830 = vmatpush1.msra.mxu0 0.0
    %1831 = vmatprep.subr.mxu0 0.0
    %1832 = vmatpush1.msra.mxu0 %v216
    %1833 = vmatprep.subr.mxu0 0.0
    %1834 = vmatpush1.msra.mxu0 %v215
    %1835 = vmatprep.subr.mxu0 0.0
    %1836 = vmatpush1.msra.mxu0 %v214
    %1837 = vmatprep.subr.mxu0 0.0
    %1838 = vmatpush1.msra.mxu0 %v213
    %1839 = vmatprep.subr.mxu0 0.0
    %1840 = vmatpush2.msra.mxu0 0.0
    %1841 = vmatprep.subr.mxu0 0.0
    %1842 = vmatpush2.msra.mxu0 0.0
    %1843 = vmatprep.subr.mxu0 0.0
    %1844 = vmatpush2.msra.mxu0 0.0
    %1845 = vmatprep.subr.mxu0 0.0
    %1846 = vmatpush2.msra.mxu0 0.0
    %1847 = vmatprep.subr.mxu0 0.0
    %1848 = vmatpush2.msra.mxu0 0.0
    %1849 = vmatprep.subr.mxu0 0.0
    %1850 = vmatpush2.msra.mxu0 0.0
    %1851 = vmatprep.subr.mxu0 0.0
    %1852 = vmatpush2.msra.mxu0 0.0
    %1853 = vmatprep.subr.mxu0 0.0
    %1854 = vmatpush2.msra.mxu0 0.0
    %1855 = vmatprep.subr.mxu0 0.0
    %1856 = vmatpush2.msra.mxu0 0.0
    %1857 = vmatprep.subr.mxu0 0.0
    %1858 = vmatpush2.msra.mxu0 0.0
    %1859 = vmatprep.subr.mxu0 0.0
    %1860 = vmatpush2.msra.mxu0 0.0
    %1861 = vmatprep.subr.mxu0 0.0
    %1862 = vmatpush2.msra.mxu0 0.0
    %1863 = vmatprep.subr.mxu0 0.0
    %1864 = vmatpush2.msra.mxu0 0.0
    %1865 = vmatprep.subr.mxu0 0.0
    %1866 = vmatpush2.msra.mxu0 0.0
    %1867 = vmatprep.subr.mxu0 0.0
    %1868 = vmatpush2.msra.mxu0 0.0
    %1869 = vmatprep.subr.mxu0 0.0
    %1870 = vmatpush2.msra.mxu0 0.0
    %1871 = vmatprep.mubr.f32.mxu0 0.0
    %1872 = vmatmul.mubr.f32.gmra.mxu0 %v1805
    %v1873 = vpop.f32.mrf.mxu0
    %v1874 = vadd.f32 %v241, %v1873
    %v1875 = vpop.f32.mrf.mxu0
    %1876 = vdwg.mxu0
    %1878 = vrot.lane.b32.xlu0 %v1705, 32
    %v1879 = vpop.permute.xlu0 %1878
    %v1880 = vsel %vm246, %v1879, 0
    %1882 = vmatprep.subr.mxu0 0.0
    %1883 = vmatpush1.msra.mxu0 0.0
    %1884 = vmatprep.subr.mxu0 0.0
    %1885 = vmatpush1.msra.mxu0 0.0
    %1886 = vmatprep.subr.mxu0 0.0
    %1887 = vmatpush1.msra.mxu0 0.0
    %1888 = vmatprep.subr.mxu0 0.0
    %1889 = vmatpush1.msra.mxu0 0.0
    %1890 = vmatprep.subr.mxu0 0.0
    %1891 = vmatpush1.msra.mxu0 0.0
    %1892 = vmatprep.subr.mxu0 0.0
    %1893 = vmatpush1.msra.mxu0 0.0
    %1894 = vmatprep.subr.mxu0 0.0
    %1895 = vmatpush1.msra.mxu0 0.0
    %1896 = vmatprep.subr.mxu0 0.0
    %1897 = vmatpush1.msra.mxu0 0.0
    %1898 = vmatprep.subr.mxu0 0.0
    %1899 = vmatpush1.msra.mxu0 0.0
    %1900 = vmatprep.subr.mxu0 0.0
    %1901 = vmatpush1.msra.mxu0 0.0
    %1902 = vmatprep.subr.mxu0 0.0
    %1903 = vmatpush1.msra.mxu0 0.0
    %1904 = vmatprep.subr.mxu0 0.0
    %1905 = vmatpush1.msra.mxu0 0.0
    %1906 = vmatprep.subr.mxu0 0.0
    %1907 = vmatpush1.msra.mxu0 %v212
    %1908 = vmatprep.subr.mxu0 0.0
    %1909 = vmatpush1.msra.mxu0 %v211
    %1910 = vmatprep.subr.mxu0 0.0
    %1911 = vmatpush1.msra.mxu0 %v210
    %1912 = vmatprep.subr.mxu0 0.0
    %1913 = vmatpush1.msra.mxu0 %v209
    %1914 = vmatprep.subr.mxu0 0.0
    %1915 = vmatpush2.msra.mxu0 0.0
    %1916 = vmatprep.subr.mxu0 0.0
    %1917 = vmatpush2.msra.mxu0 0.0
    %1918 = vmatprep.subr.mxu0 0.0
    %1919 = vmatpush2.msra.mxu0 0.0
    %1920 = vmatprep.subr.mxu0 0.0
    %1921 = vmatpush2.msra.mxu0 0.0
    %1922 = vmatprep.subr.mxu0 0.0
    %1923 = vmatpush2.msra.mxu0 0.0
    %1924 = vmatprep.subr.mxu0 0.0
    %1925 = vmatpush2.msra.mxu0 0.0
    %1926 = vmatprep.subr.mxu0 0.0
    %1927 = vmatpush2.msra.mxu0 0.0
    %1928 = vmatprep.subr.mxu0 0.0
    %1929 = vmatpush2.msra.mxu0 0.0
    %1930 = vmatprep.subr.mxu0 0.0
    %1931 = vmatpush2.msra.mxu0 0.0
    %1932 = vmatprep.subr.mxu0 0.0
    %1933 = vmatpush2.msra.mxu0 0.0
    %1934 = vmatprep.subr.mxu0 0.0
    %1935 = vmatpush2.msra.mxu0 0.0
    %1936 = vmatprep.subr.mxu0 0.0
    %1937 = vmatpush2.msra.mxu0 0.0
    %1938 = vmatprep.subr.mxu0 0.0
    %1939 = vmatpush2.msra.mxu0 0.0
    %1940 = vmatprep.subr.mxu0 0.0
    %1941 = vmatpush2.msra.mxu0 0.0
    %1942 = vmatprep.subr.mxu0 0.0
    %1943 = vmatpush2.msra.mxu0 0.0
    %1944 = vmatprep.subr.mxu0 0.0
    %1945 = vmatpush2.msra.mxu0 0.0
    %1946 = vmatprep.mubr.f32.mxu0 0.0
    %1947 = vmatmul.mubr.f32.gmra.mxu0 %v1880
    %v1948 = vpop.f32.mrf.mxu0
    %v1949 = vadd.f32 0.0, %v1948
    %v1950 = vpop.f32.mrf.mxu0
    %1951 = vdwg.mxu0
    %v1952 = vadd.f32 %v1874, %v1949
    %v1953 = vxor.u32 %v1952, 2147483648
    %v1954 = vmul.f32 %v1953, 1.442695
    %v1955 = vpow.pop %v1954
    %v1956 = vadd.f32 %v1955, 1.0
    %v1957 = vrcp.pop %v1956
    %v1958 = vmul.f32 1.0, %v1957
    %v1959 = vmul.f32 %v1958, 2.0
    %v1960 = vsub.f32 %v1959, 1.0
    %v1961 = vmul.f32 %v1958, %v1699
    %1963 = vrot.lane.b32.xlu0 %v1960, 64
    %v1964 = vpop.permute.xlu0 %1963
    %v1966 = vmul.f32 %v1958, %v1964
    %1968 = vrot.lane.b32.xlu0 %v1966, 32
    %v1969 = vpop.permute.xlu0 %1968
    %v1971 = vadd.f32 %v1961, %v1969
    %v1972 = vtanh.pop %v1971
    %1974 = vrot.lane.b32.xlu0 %v1972, 64
    %v1975 = vpop.permute.xlu0 %1974
    %v1977 = vmul.f32 %v1958, %v1975
    %1978 = vmatprep.subr.mxu0 0.0
    %1979 = vmatpush1.msra.mxu0 0.0
    %1980 = vmatprep.subr.mxu0 0.0
    %1981 = vmatpush1.msra.mxu0 0.0
    %1982 = vmatprep.subr.mxu0 0.0
    %1983 = vmatpush1.msra.mxu0 0.0
    %1984 = vmatprep.subr.mxu0 0.0
    %1985 = vmatpush1.msra.mxu0 0.0
    %1986 = vmatprep.subr.mxu0 0.0
    %1987 = vmatpush1.msra.mxu0 0.0
    %1988 = vmatprep.subr.mxu0 0.0
    %1989 = vmatpush1.msra.mxu0 0.0
    %1990 = vmatprep.subr.mxu0 0.0
    %1991 = vmatpush1.msra.mxu0 0.0
    %1992 = vmatprep.subr.mxu0 0.0
    %1993 = vmatpush1.msra.mxu0 0.0
    %1994 = vmatprep.subr.mxu0 0.0
    %1995 = vmatpush1.msra.mxu0 0.0
    %1996 = vmatprep.subr.mxu0 0.0
    %1997 = vmatpush1.msra.mxu0 0.0
    %1998 = vmatprep.subr.mxu0 0.0
    %1999 = vmatpush1.msra.mxu0 0.0
    %2000 = vmatprep.subr.mxu0 0.0
    %2001 = vmatpush1.msra.mxu0 0.0
    %2002 = vmatprep.subr.mxu0 0.0
    %2003 = vmatpush1.msra.mxu0 %v208
    %2004 = vmatprep.subr.mxu0 0.0
    %2005 = vmatpush1.msra.mxu0 %v207
    %2006 = vmatprep.subr.mxu0 0.0
    %2007 = vmatpush1.msra.mxu0 %v206
    %2008 = vmatprep.subr.mxu0 0.0
    %2009 = vmatpush1.msra.mxu0 %v205
    %2010 = vmatprep.subr.mxu0 0.0
    %2011 = vmatpush2.msra.mxu0 0.0
    %2012 = vmatprep.subr.mxu0 0.0
    %2013 = vmatpush2.msra.mxu0 0.0
    %2014 = vmatprep.subr.mxu0 0.0
    %2015 = vmatpush2.msra.mxu0 0.0
    %2016 = vmatprep.subr.mxu0 0.0
    %2017 = vmatpush2.msra.mxu0 0.0
    %2018 = vmatprep.subr.mxu0 0.0
    %2019 = vmatpush2.msra.mxu0 0.0
    %2020 = vmatprep.subr.mxu0 0.0
    %2021 = vmatpush2.msra.mxu0 0.0
    %2022 = vmatprep.subr.mxu0 0.0
    %2023 = vmatpush2.msra.mxu0 0.0
    %2024 = vmatprep.subr.mxu0 0.0
    %2025 = vmatpush2.msra.mxu0 0.0
    %2026 = vmatprep.subr.mxu0 0.0
    %2027 = vmatpush2.msra.mxu0 0.0
    %2028 = vmatprep.subr.mxu0 0.0
    %2029 = vmatpush2.msra.mxu0 0.0
    %2030 = vmatprep.subr.mxu0 0.0
    %2031 = vmatpush2.msra.mxu0 0.0
    %2032 = vmatprep.subr.mxu0 0.0
    %2033 = vmatpush2.msra.mxu0 0.0
    %2034 = vmatprep.subr.mxu0 0.0
    %2035 = vmatpush2.msra.mxu0 0.0
    %2036 = vmatprep.subr.mxu0 0.0
    %2037 = vmatpush2.msra.mxu0 0.0
    %2038 = vmatprep.subr.mxu0 0.0
    %2039 = vmatpush2.msra.mxu0 0.0
    %2040 = vmatprep.subr.mxu0 0.0
    %2041 = vmatpush2.msra.mxu0 0.0
    %2042 = vmatprep.mubr.f32.mxu0 0.0
    %2043 = vmatmul.mubr.f32.gmra.mxu0 %v1805
    %v2044 = vpop.f32.mrf.mxu0
    %v2045 = vadd.f32 0.0, %v2044
    %v2046 = vpop.f32.mrf.mxu0
    %2047 = vdwg.mxu0
    %v2048 = vadd.f32 %v202, %v2045
    %v2049 = vxor.u32 %v2048, 2147483648
    %v2050 = vmul.f32 %v2049, 1.442695
    %v2051 = vpow.pop %v2050
    %v2052 = vadd.f32 %v2051, 1.0
    %v2053 = vrcp.pop %v2052
    %v2054 = vmul.f32 1.0, %v2053
    %v2055 = vmul.f32 %v2054, 2.0
    %v2056 = vsub.f32 %v2055, 1.0
    %v2057 = vmul.f32 %v2054, %v1795
    %2059 = vrot.lane.b32.xlu0 %v2056, 64
    %v2060 = vpop.permute.xlu0 %2059
    %v2062 = vmul.f32 %v2054, %v2060
    %2064 = vrot.lane.b32.xlu0 %v2062, 32
    %v2065 = vpop.permute.xlu0 %2064
    %v2067 = vadd.f32 %v2057, %v2065
    %v2068 = vtanh.pop %v2067
    %2070 = vrot.lane.b32.xlu0 %v2068, 64
    %v2071 = vpop.permute.xlu0 %2070
    %v2073 = vmul.f32 %v2054, %v2071
    %2075 = vrot.lane.b32.xlu0 %v2073, 32
    %v2076 = vpop.permute.xlu0 %2075
    %v2077 = vsel %vm246, %v2076, 0
    %2079 = vmatprep.subr.mxu0 0.0
    %2080 = vmatpush1.msra.mxu0 0.0
    %2081 = vmatprep.subr.mxu0 0.0
    %2082 = vmatpush1.msra.mxu0 0.0
    %2083 = vmatprep.subr.mxu0 0.0
    %2084 = vmatpush1.msra.mxu0 0.0
    %2085 = vmatprep.subr.mxu0 0.0
    %2086 = vmatpush1.msra.mxu0 0.0
    %2087 = vmatprep.subr.mxu0 0.0
    %2088 = vmatpush1.msra.mxu0 0.0
    %2089 = vmatprep.subr.mxu0 0.0
    %2090 = vmatpush1.msra.mxu0 0.0
    %2091 = vmatprep.subr.mxu0 0.0
    %2092 = vmatpush1.msra.mxu0 0.0
    %2093 = vmatprep.subr.mxu0 0.0
    %2094 = vmatpush1.msra.mxu0 0.0
    %2095 = vmatprep.subr.mxu0 0.0
    %2096 = vmatpush1.msra.mxu0 0.0
    %2097 = vmatprep.subr.mxu0 0.0
    %2098 = vmatpush1.msra.mxu0 0.0
    %2099 = vmatprep.subr.mxu0 0.0
    %2100 = vmatpush1.msra.mxu0 0.0
    %2101 = vmatprep.subr.mxu0 0.0
    %2102 = vmatpush1.msra.mxu0 0.0
    %2103 = vmatprep.subr.mxu0 0.0
    %2104 = vmatpush1.msra.mxu0 %v216
    %2105 = vmatprep.subr.mxu0 0.0
    %2106 = vmatpush1.msra.mxu0 %v215
    %2107 = vmatprep.subr.mxu0 0.0
    %2108 = vmatpush1.msra.mxu0 %v214
    %2109 = vmatprep.subr.mxu0 0.0
    %2110 = vmatpush1.msra.mxu0 %v213
    %2111 = vmatprep.subr.mxu0 0.0
    %2112 = vmatpush2.msra.mxu0 0.0
    %2113 = vmatprep.subr.mxu0 0.0
    %2114 = vmatpush2.msra.mxu0 0.0
    %2115 = vmatprep.subr.mxu0 0.0
    %2116 = vmatpush2.msra.mxu0 0.0
    %2117 = vmatprep.subr.mxu0 0.0
    %2118 = vmatpush2.msra.mxu0 0.0
    %2119 = vmatprep.subr.mxu0 0.0
    %2120 = vmatpush2.msra.mxu0 0.0
    %2121 = vmatprep.subr.mxu0 0.0
    %2122 = vmatpush2.msra.mxu0 0.0
    %2123 = vmatprep.subr.mxu0 0.0
    %2124 = vmatpush2.msra.mxu0 0.0
    %2125 = vmatprep.subr.mxu0 0.0
    %2126 = vmatpush2.msra.mxu0 0.0
    %2127 = vmatprep.subr.mxu0 0.0
    %2128 = vmatpush2.msra.mxu0 0.0
    %2129 = vmatprep.subr.mxu0 0.0
    %2130 = vmatpush2.msra.mxu0 0.0
    %2131 = vmatprep.subr.mxu0 0.0
    %2132 = vmatpush2.msra.mxu0 0.0
    %2133 = vmatprep.subr.mxu0 0.0
    %2134 = vmatpush2.msra.mxu0 0.0
    %2135 = vmatprep.subr.mxu0 0.0
    %2136 = vmatpush2.msra.mxu0 0.0
    %2137 = vmatprep.subr.mxu0 0.0
    %2138 = vmatpush2.msra.mxu0 0.0
    %2139 = vmatprep.subr.mxu0 0.0
    %2140 = vmatpush2.msra.mxu0 0.0
    %2141 = vmatprep.subr.mxu0 0.0
    %2142 = vmatpush2.msra.mxu0 0.0
    %2143 = vmatprep.mubr.f32.mxu0 0.0
    %2144 = vmatmul.mubr.f32.gmra.mxu0 %v2077
    %v2145 = vpop.f32.mrf.mxu0
    %v2146 = vadd.f32 %v241, %v2145
    %v2147 = vpop.f32.mrf.mxu0
    %2148 = vdwg.mxu0
    %2150 = vrot.lane.b32.xlu0 %v1977, 32
    %v2151 = vpop.permute.xlu0 %2150
    %v2152 = vsel %vm246, %v2151, 0
    %2154 = vmatprep.subr.mxu0 0.0
    %2155 = vmatpush1.msra.mxu0 0.0
    %2156 = vmatprep.subr.mxu0 0.0
    %2157 = vmatpush1.msra.mxu0 0.0
    %2158 = vmatprep.subr.mxu0 0.0
    %2159 = vmatpush1.msra.mxu0 0.0
    %2160 = vmatprep.subr.mxu0 0.0
    %2161 = vmatpush1.msra.mxu0 0.0
    %2162 = vmatprep.subr.mxu0 0.0
    %2163 = vmatpush1.msra.mxu0 0.0
    %2164 = vmatprep.subr.mxu0 0.0
    %2165 = vmatpush1.msra.mxu0 0.0
    %2166 = vmatprep.subr.mxu0 0.0
    %2167 = vmatpush1.msra.mxu0 0.0
    %2168 = vmatprep.subr.mxu0 0.0
    %2169 = vmatpush1.msra.mxu0 0.0
    %2170 = vmatprep.subr.mxu0 0.0
    %2171 = vmatpush1.msra.mxu0 0.0
    %2172 = vmatprep.subr.mxu0 0.0
    %2173 = vmatpush1.msra.mxu0 0.0
    %2174 = vmatprep.subr.mxu0 0.0
    %2175 = vmatpush1.msra.mxu0 0.0
    %2176 = vmatprep.subr.mxu0 0.0
    %2177 = vmatpush1.msra.mxu0 0.0
    %2178 = vmatprep.subr.mxu0 0.0
    %2179 = vmatpush1.msra.mxu0 %v212
    %2180 = vmatprep.subr.mxu0 0.0
    %2181 = vmatpush1.msra.mxu0 %v211
    %2182 = vmatprep.subr.mxu0 0.0
    %2183 = vmatpush1.msra.mxu0 %v210
    %2184 = vmatprep.subr.mxu0 0.0
    %2185 = vmatpush1.msra.mxu0 %v209
    %2186 = vmatprep.subr.mxu0 0.0
    %2187 = vmatpush2.msra.mxu0 0.0
    %2188 = vmatprep.subr.mxu0 0.0
    %2189 = vmatpush2.msra.mxu0 0.0
    %2190 = vmatprep.subr.mxu0 0.0
    %2191 = vmatpush2.msra.mxu0 0.0
    %2192 = vmatprep.subr.mxu0 0.0
    %2193 = vmatpush2.msra.mxu0 0.0
    %2194 = vmatprep.subr.mxu0 0.0
    %2195 = vmatpush2.msra.mxu0 0.0
    %2196 = vmatprep.subr.mxu0 0.0
    %2197 = vmatpush2.msra.mxu0 0.0
    %2198 = vmatprep.subr.mxu0 0.0
    %2199 = vmatpush2.msra.mxu0 0.0
    %2200 = vmatprep.subr.mxu0 0.0
    %2201 = vmatpush2.msra.mxu0 0.0
    %2202 = vmatprep.subr.mxu0 0.0
    %2203 = vmatpush2.msra.mxu0 0.0
    %2204 = vmatprep.subr.mxu0 0.0
    %2205 = vmatpush2.msra.mxu0 0.0
    %2206 = vmatprep.subr.mxu0 0.0
    %2207 = vmatpush2.msra.mxu0 0.0
    %2208 = vmatprep.subr.mxu0 0.0
    %2209 = vmatpush2.msra.mxu0 0.0
    %2210 = vmatprep.subr.mxu0 0.0
    %2211 = vmatpush2.msra.mxu0 0.0
    %2212 = vmatprep.subr.mxu0 0.0
    %2213 = vmatpush2.msra.mxu0 0.0
    %2214 = vmatprep.subr.mxu0 0.0
    %2215 = vmatpush2.msra.mxu0 0.0
    %2216 = vmatprep.subr.mxu0 0.0
    %2217 = vmatpush2.msra.mxu0 0.0
    %2218 = vmatprep.mubr.f32.mxu0 0.0
    %2219 = vmatmul.mubr.f32.gmra.mxu0 %v2152
    %v2220 = vpop.f32.mrf.mxu0
    %v2221 = vadd.f32 0.0, %v2220
    %v2222 = vpop.f32.mrf.mxu0
    %2223 = vdwg.mxu0
    %v2224 = vadd.f32 %v2146, %v2221
    %v2225 = vxor.u32 %v2224, 2147483648
    %v2226 = vmul.f32 %v2225, 1.442695
    %v2227 = vpow.pop %v2226
    %v2228 = vadd.f32 %v2227, 1.0
    %v2229 = vrcp.pop %v2228
    %v2230 = vmul.f32 1.0, %v2229
    %v2231 = vmul.f32 %v2230, 2.0
    %v2232 = vsub.f32 %v2231, 1.0
    %v2233 = vmul.f32 %v2230, %v1971
    %2235 = vrot.lane.b32.xlu0 %v2232, 64
    %v2236 = vpop.permute.xlu0 %2235
    %v2238 = vmul.f32 %v2230, %v2236
    %2240 = vrot.lane.b32.xlu0 %v2238, 32
    %v2241 = vpop.permute.xlu0 %2240
    %v2243 = vadd.f32 %v2233, %v2241
    %v2244 = vtanh.pop %v2243
    %2246 = vrot.lane.b32.xlu0 %v2244, 64
    %v2247 = vpop.permute.xlu0 %2246
    %v2249 = vmul.f32 %v2230, %v2247
    %v2250 = vld [vmem:[#allocation2] sm:$0xff]
    %v2251 = vld [vmem:[#allocation2 + $0x8] sm:$0xff]
    %v2252 = vld [vmem:[#allocation2 + $0x10] sm:$0xff]
    %v2253 = vld [vmem:[#allocation2 + $0x18] sm:$0xff]
    %v2254 = vld [vmem:[#allocation4] sm:$0x1]
    %v2256 = vlaneseq
    %v2257 = vshrl.u32 %v2256, 7
    %v2258 = vsub.s32 0, %v2257
    %v2259 = vrot.slane %v2254, %v2258
    %2262 = vrot.lane.b32.xlu0 %v2249, 32
    %v2263 = vpop.permute.xlu0 %2262
    %v2264 = vsel %vm246, %v2263, 0
    %2266 = vmatprep.subr.mxu0 0.0
    %2267 = vmatpush1.msra.mxu0 0.0
    %2268 = vmatprep.subr.mxu0 0.0
    %2269 = vmatpush1.msra.mxu0 0.0
    %2270 = vmatprep.subr.mxu0 0.0
    %2271 = vmatpush1.msra.mxu0 0.0
    %2272 = vmatprep.subr.mxu0 0.0
    %2273 = vmatpush1.msra.mxu0 0.0
    %2274 = vmatprep.subr.mxu0 0.0
    %2275 = vmatpush1.msra.mxu0 0.0
    %2276 = vmatprep.subr.mxu0 0.0
    %2277 = vmatpush1.msra.mxu0 0.0
    %2278 = vmatprep.subr.mxu0 0.0
    %2279 = vmatpush1.msra.mxu0 0.0
    %2280 = vmatprep.subr.mxu0 0.0
    %2281 = vmatpush1.msra.mxu0 0.0
    %2282 = vmatprep.subr.mxu0 0.0
    %2283 = vmatpush1.msra.mxu0 0.0
    %2284 = vmatprep.subr.mxu0 0.0
    %2285 = vmatpush1.msra.mxu0 0.0
    %2286 = vmatprep.subr.mxu0 0.0
    %2287 = vmatpush1.msra.mxu0 0.0
    %2288 = vmatprep.subr.mxu0 0.0
    %2289 = vmatpush1.msra.mxu0 0.0
    %2290 = vmatprep.subr.mxu0 0.0
    %2291 = vmatpush1.msra.mxu0 %v2253
    %2292 = vmatprep.subr.mxu0 0.0
    %2293 = vmatpush1.msra.mxu0 %v2252
    %2294 = vmatprep.subr.mxu0 0.0
    %2295 = vmatpush1.msra.mxu0 %v2251
    %2296 = vmatprep.subr.mxu0 0.0
    %2297 = vmatpush1.msra.mxu0 %v2250
    %2298 = vmatprep.subr.mxu0 0.0
    %2299 = vmatpush2.msra.mxu0 0.0
    %2300 = vmatprep.subr.mxu0 0.0
    %2301 = vmatpush2.msra.mxu0 0.0
    %2302 = vmatprep.subr.mxu0 0.0
    %2303 = vmatpush2.msra.mxu0 0.0
    %2304 = vmatprep.subr.mxu0 0.0
    %2305 = vmatpush2.msra.mxu0 0.0
    %2306 = vmatprep.subr.mxu0 0.0
    %2307 = vmatpush2.msra.mxu0 0.0
    %2308 = vmatprep.subr.mxu0 0.0
    %2309 = vmatpush2.msra.mxu0 0.0
    %2310 = vmatprep.subr.mxu0 0.0
    %2311 = vmatpush2.msra.mxu0 0.0
    %2312 = vmatprep.subr.mxu0 0.0
    %2313 = vmatpush2.msra.mxu0 0.0
    %2314 = vmatprep.subr.mxu0 0.0
    %2315 = vmatpush2.msra.mxu0 0.0
    %2316 = vmatprep.subr.mxu0 0.0
    %2317 = vmatpush2.msra.mxu0 0.0
    %2318 = vmatprep.subr.mxu0 0.0
    %2319 = vmatpush2.msra.mxu0 0.0
    %2320 = vmatprep.subr.mxu0 0.0
    %2321 = vmatpush2.msra.mxu0 0.0
    %2322 = vmatprep.subr.mxu0 0.0
    %2323 = vmatpush2.msra.mxu0 0.0
    %2324 = vmatprep.subr.mxu0 0.0
    %2325 = vmatpush2.msra.mxu0 0.0
    %2326 = vmatprep.subr.mxu0 0.0
    %2327 = vmatpush2.msra.mxu0 0.0
    %2328 = vmatprep.subr.mxu0 0.0
    %2329 = vmatpush2.msra.mxu0 0.0
    %2330 = vmatprep.mubr.f32.mxu0 0.0
    %2331 = vmatmul.mubr.f32.gmra.mxu0 %v2264
    %v2332 = vpop.f32.mrf.mxu0
    %v2333 = vadd.f32 %v2259, %v2332
    %v2334 = vpop.f32.mrf.mxu0
    %2335 = vdwg.mxu0
    %2336 = vst [vmem:[%s9] sm:$0xff] %v2333
    // Predicated region
    $region46: #{my_module_forward.1} parent=1 // pred_check
      _
    $region47: #{my_module_forward.1} parent=1 // pred_check_branch
      %2338 = sbr.rel (0) target = $region49
    $region48: #{my_module_forward.1} parent=1 // pred_region
      _
    $region49: #{my_module_forward.1} parent=1 // pred_fallthru
      _
    // Predicated region
    $region50: #{my_module_forward.1} parent=1 // pred_check
      _
    $region51: #{my_module_forward.1} parent=1 // pred_check_branch
      %2340 = sbr.rel (0) target = $region53
    $region52: #{my_module_forward.1} parent=1 // pred_region
      _
    $region53: #{my_module_forward.1} parent=1 // pred_fallthru
      _
    %2341 = vsyncpa [#allocation3], 1
    %2342 = vsyncpa [#allocation5], 1

</llo_original>
